<compile_context>
chip_gen: v7x
topology: tpu7x:2x2x1
jax: 0.10.0
libtpu: 0.0.40
codegen_flags: <defaults>
</compile_context>

<pallas_src>
import numpy as np

import jax
import jax.numpy as jnp
from jax import lax
from jax.experimental import pallas as pl
from jax.experimental.pallas import tpu as pltpu


# ----------------------------------------------------------------------------
# Host-side packing (done once per shape; cacheable).
# ----------------------------------------------------------------------------
def _pack_conv_weights(w, b, W, cin_pad):
    """w: (3,3,Cin,Cout) HWIO, b: (Cout,)  ->
       wk: (3*W*cin_pad, W*Cout) K-stacked banded matrix, bp: (1, W*Cout).

    out[y, x*Cout+co] = bias + [row_{y-1} | row_y | row_{y+1}] @ wk
    where rows are lane-packed (W*cin_pad,) image rows; the kx taps and the W
    zero-padding are folded into the banded matrix; channel padding rows are
    zero."""
    w = np.asarray(w, np.float32)
    b = np.asarray(b, np.float32)
    _, _, cin, cout = w.shape
    wk = np.zeros((3, W * cin_pad, W * cout), np.float32)
    for ky in range(3):
        for kx in range(3):
            for x in range(W):
                xx = x + kx - 1          # input column feeding output col x
                if 0 <= xx < W:          # taps outside the image contribute 0
                    wk[ky, xx * cin_pad:xx * cin_pad + cin,
                           x * cout:(x + 1) * cout] = w[ky, kx]
    wk = wk.reshape(3 * W * cin_pad, W * cout)   # stack ky along K
    bp = np.tile(b, W).reshape(1, W * cout)
    return wk, bp


def _interp_matrix_np(out_size, in_size):
    """PyTorch bilinear, align_corners=False -> (out_size, in_size) matrix."""
    scale = in_size / out_size
    dst = np.arange(out_size, dtype=np.float64)
    src = np.clip((dst + 0.5) * scale - 0.5, 0.0, in_size - 1)
    lo = np.floor(src).astype(np.int64)
    hi = np.minimum(lo + 1, in_size - 1)
    w_hi = (src - lo).astype(np.float32)
    w_lo = (1.0 - w_hi).astype(np.float32)
    m = np.zeros((out_size, in_size), np.float32)
    idx = np.arange(out_size)
    np.add.at(m, (idx, lo), w_lo)
    np.add.at(m, (idx, hi), w_hi)
    return m


def _pack_params(params, W, cin_pad, c):
    w1, b1 = _pack_conv_weights(params['convFS1_w'], params['convFS1_b'],
                                W, cin_pad)
    wrest, biases = [], [b1]
    for nm in ('convFS2', 'convFS3', 'convMM1', 'convMM2'):
        wk, bp = _pack_conv_weights(params[nm + '_w'], params[nm + '_b'], W, c)
        wrest.append(wk)
        biases.append(bp)
    return (jnp.asarray(w1, jnp.bfloat16),               # (3*W*cin_pad, W*c)
            jnp.asarray(np.stack(wrest), jnp.bfloat16),  # (4, 3*W*c, W*c)
            jnp.asarray(np.stack(biases), jnp.float32))  # (5, 1, W*c)


# ----------------------------------------------------------------------------
# Fused kernel: the whole Refine.forward, whole batch in one grid step.
# Activation layout: (T, W*C) with T = N*(H+2); rows n*(H+2) and
# n*(H+2)+H+1 are zero separator rows (shared zero H-padding).
# ----------------------------------------------------------------------------
def _refine_fused_kernel(fp_ref, pm_ref, w1_ref, wr_ref, b_ref, mask_ref,
                         ryf_ref, rxc_ref, o_ref):
    T = o_ref.shape[0]
    # Hoisted (T, W*c) row mask: 1 on data rows, 0 on separator rows.
    mask_full = jnp.broadcast_to(mask_ref[...], o_ref.shape)

    def conv3x3(x, wmat, bias, relu_in):
        # x: (T, L) f32, zero separator rows; wmat: (3L, W*c) bf16; bias (1, W*c)
        if relu_in:
            x = jnp.maximum(x, 0.0)
        zrow = jnp.zeros((1, x.shape[1]), jnp.float32)
        xp = jnp.concatenate([zrow, x, zrow], axis=0)            # (T+2, L)
        lhs = jnp.concatenate([xp[0:T], x, xp[2:T + 2]], axis=-1)  # (T, 3L)
        acc = bias + jnp.dot(lhs.astype(jnp.bfloat16), wmat,
                             preferred_element_type=jnp.float32)   # 1 MXU push
        return acc * mask_full                   # re-zero separator rows

    f = fp_ref[...]                              # (T, W*cin_pad) f32
    pm = pm_ref[...]                             # (N*h, w*c)     f32

    s = conv3x3(f, w1_ref[...], b_ref[0], relu_in=False)          # convFS1
    sr = conv3x3(s, wr_ref[0], b_ref[1], relu_in=True)            # convFS2
    sr = conv3x3(sr, wr_ref[1], b_ref[2], relu_in=True)           # convFS3
    s = s + sr

    # bilinear upsample of pm into the padded layout, then add.
    # ryf is block-diagonal over the batch with zero separator rows.
    up = jnp.dot(ryf_ref[...], pm.astype(jnp.bfloat16),
                 preferred_element_type=jnp.float32)               # (T, w*c)
    up = jnp.dot(up.astype(jnp.bfloat16), rxc_ref[...],
                 preferred_element_type=jnp.float32)               # (T, W*c)
    m = s + up

    mr = conv3x3(m, wr_ref[2], b_ref[3], relu_in=True)             # convMM1
    mr = conv3x3(mr, wr_ref[3], b_ref[4], relu_in=True)            # convMM2
    o_ref[...] = m + mr


# ----------------------------------------------------------------------------
# Wrappers
# ----------------------------------------------------------------------------
def refine_forward_nhwc(f, pm, params):
    """f: (N,H,W,inplanes), pm: (N,h,w,planes) -> (N,H,W,planes), NHWC."""
    N, H, W, cin = f.shape
    _, h, w, c = pm.shape

    # pad Cin so the packed f row is lane-dense (multiple of 128 lanes).
    if W <= 128 and 128 % W == 0:
        g = 128 // W
        cin_pad = -(-cin // g) * g
    else:
        cin_pad = cin
    T = N * (H + 2)

    w1, wr, b_all = _pack_params(params, W, cin_pad, c)

    # block-diagonal row-interp matrix mapping pm rows -> padded layout rows
    ry = _interp_matrix_np(H, h)                                   # (H, h)
    ryf = np.zeros((T, N * h), np.float32)
    msk = np.zeros((T, 1), np.float32)
    for n in range(N):
        r0 = n * (H + 2) + 1
        ryf[r0:r0 + H, n * h:(n + 1) * h] = ry
        msk[r0:r0 + H, 0] = 1.0
    rxc = np.kron(_interp_matrix_np(W, w).T,
                  np.eye(c, dtype=np.float32))                     # (w*c, W*c)

    ryf_j = jnp.asarray(ryf, jnp.bfloat16)
    rxc_j = jnp.asarray(rxc, jnp.bfloat16)
    msk_j = jnp.asarray(msk, jnp.float32)

    # padded, lane-packed activations
    fp = jnp.pad(f, ((0, 0), (1, 1), (0, 0), (0, cin_pad - cin)))
    fp = fp.reshape(T, W * cin_pad)
    pm_flat = pm.reshape(N * h, w * c)

    out = pl.pallas_call(
        _refine_fused_kernel,
        out_shape=jax.ShapeDtypeStruct((T, W * c), jnp.float32),
        grid_spec=pltpu.PrefetchScalarGridSpec(
            num_scalar_prefetch=0,
            grid=(1,),
            in_specs=[
                pl.BlockSpec((T, W * cin_pad), lambda n: (0, 0)),
                pl.BlockSpec((N * h, w * c), lambda n: (0, 0)),
                pl.BlockSpec((3 * W * cin_pad, W * c), lambda n: (0, 0)),
                pl.BlockSpec((4, 3 * W * c, W * c), lambda n: (0, 0, 0)),
                pl.BlockSpec((5, 1, W * c), lambda n: (0, 0, 0)),
                pl.BlockSpec((T, 1), lambda n: (0, 0)),
                pl.BlockSpec((T, N * h), lambda n: (0, 0)),
                pl.BlockSpec((w * c, W * c), lambda n: (0, 0)),
            ],
            out_specs=pl.BlockSpec((T, W * c), lambda n: (0, 0)),
        ),
        compiler_params=pltpu.CompilerParams(
            dimension_semantics=("arbitrary",)),
    )(fp, pm_flat, w1, wr, b_all, msk_j, ryf_j, rxc_j)

    # drop the separator rows
    return out.reshape(N, H + 2, W, c)[:, 1:H + 1]


def refine_forward(f_nchw, pm_nchw, params):
    """PyTorch-interface wrapper (NCHW in / NCHW out)."""
    f = jnp.transpose(f_nchw, (0, 2, 3, 1))
    pm = jnp.transpose(pm_nchw, (0, 2, 3, 1))
    m = refine_forward_nhwc(f, pm, params)
    return jnp.transpose(m, (0, 3, 1, 2))


# ----------------------------------------------------------------------------
# Plain-JAX f32 reference (same math) used only for a correctness check.
# ----------------------------------------------------------------------------
def _conv_ref(x, w, b):
    y = lax.conv_general_dilated(x, w, (1, 1), 'SAME',
                                 dimension_numbers=('NHWC', 'HWIO', 'NHWC'))
    return y + b


def refine_reference(f_nchw, pm_nchw, params):
    f = jnp.transpose(f_nchw, (0, 2, 3, 1))
    pm = jnp.transpose(pm_nchw, (0, 2, 3, 1))
    s = _conv_ref(f, params['convFS1_w'], params['convFS1_b'])
    sr = _conv_ref(jnp.maximum(s, 0), params['convFS2_w'], params['convFS2_b'])
    sr = _conv_ref(jnp.maximum(sr, 0), params['convFS3_w'], params['convFS3_b'])
    s = s + sr
    H, W = s.shape[1], s.shape[2]
    ry = jnp.asarray(_interp_matrix_np(H, pm.shape[1]))
    rx = jnp.asarray(_interp_matrix_np(W, pm.shape[2]))
    up = jnp.einsum('Yh,Xw,nhwc->nYXc', ry, rx, pm)
    m = s + up
    mr = _conv_ref(jnp.maximum(m, 0), params['convMM1_w'], params['convMM1_b'])
    mr = _conv_ref(jnp.maximum(mr, 0), params['convMM2_w'], params['convMM2_b'])
    m = m + mr
    return jnp.transpose(m, (0, 3, 1, 2))


if __name__ == "__main__":
    key = jax.random.PRNGKey(0)
    N, inplanes, planes = 2, 4, 8
    H = W = 16          # f spatial size
    h = w = 8           # pm spatial size (upsampled to HxW, scale_factor=2)

    keys = jax.random.split(key, 12)

    def conv_params(kw, kb, cin, cout):
        scale = 1.0 / (3 * 3 * cin) ** 0.5
        return (jax.random.normal(kw, (3, 3, cin, cout), jnp.float32) * scale,
                jax.random.normal(kb, (cout,), jnp.float32) * scale)

    params = {}
    names = ['convFS1', 'convFS2', 'convFS3', 'convMM1', 'convMM2']
    cins = [inplanes, planes, planes, planes, planes]
    for i, (nm, cin) in enumerate(zip(names, cins)):
        pw, pb = conv_params(keys[2 * i], keys[2 * i + 1], cin, planes)
        params[nm + '_w'] = pw
        params[nm + '_b'] = pb

    f = jax.random.normal(keys[10], (N, inplanes, H, W), jnp.float32)
    pm = jax.random.normal(keys[11], (N, planes, h, w), jnp.float32)

    out = jax.block_until_ready(refine_forward(f, pm, params))
    ref = refine_reference(f, pm, params)

    assert out.shape == (N, planes, H, W), out.shape
    max_err = float(jnp.max(jnp.abs(out - ref)))
    # bf16 weights / matmul operands (f32 accumulation): allow ~2% of max |ref|
    tol = 2e-2 * float(jnp.max(jnp.abs(ref))) + 1e-3
    assert max_err < tol, f"mismatch vs reference: {max_err} (tol {tol})"
    print("KERNEL_OK")
</pallas_src>

<mosaic_0001>
module attributes {stable_mosaic.version = 11 : i64} {
  func.func @_refine_fused_kernel(%arg0: i32, %arg1: memref<36x128xf32, #tpu.memory_space<vmem>>, %arg2: memref<16x64xf32, #tpu.memory_space<vmem>>, %arg3: memref<384x128xbf16, #tpu.memory_space<vmem>>, %arg4: memref<4x384x128xbf16, #tpu.memory_space<vmem>>, %arg5: memref<5x1x128xf32, #tpu.memory_space<vmem>>, %arg6: memref<36x1xf32, #tpu.memory_space<vmem>>, %arg7: memref<36x16xbf16, #tpu.memory_space<vmem>>, %arg8: memref<64x128xbf16, #tpu.memory_space<vmem>>, %arg9: memref<36x128xf32, #tpu.memory_space<vmem>>) attributes {dimension_semantics = [#tpu.dimension_semantics<arbitrary>], iteration_bounds = array<i64: 1>, scalar_prefetch = 0 : i64, scratch_operands = 0 : i64, tpu.core_type = #tpu.core_type<tc>, window_params = [{pipeline_mode = #tpu.pipeline_mode<synchronous>, transform_indices = @transform_0, window_bounds = array<i64: 36, 128>}, {pipeline_mode = #tpu.pipeline_mode<synchronous>, transform_indices = @transform_1, window_bounds = array<i64: 16, 64>}, {pipeline_mode = #tpu.pipeline_mode<synchronous>, transform_indices = @transform_2, window_bounds = array<i64: 384, 128>}, {pipeline_mode = #tpu.pipeline_mode<synchronous>, transform_indices = @transform_3, window_bounds = array<i64: 4, 384, 128>}, {pipeline_mode = #tpu.pipeline_mode<synchronous>, transform_indices = @transform_4, window_bounds = array<i64: 5, 1, 128>}, {pipeline_mode = #tpu.pipeline_mode<synchronous>, transform_indices = @transform_5, window_bounds = array<i64: 36, 1>}, {pipeline_mode = #tpu.pipeline_mode<synchronous>, transform_indices = @transform_6, window_bounds = array<i64: 36, 16>}, {pipeline_mode = #tpu.pipeline_mode<synchronous>, transform_indices = @transform_7, window_bounds = array<i64: 64, 128>}, {pipeline_mode = #tpu.pipeline_mode<synchronous>, transform_indices = @transform_8, window_bounds = array<i64: 36, 128>}]} {
    %c0 = arith.constant 0 : index
    %c0_0 = arith.constant 0 : index
    %0 = vector.load %arg6[%c0, %c0_0] : memref<36x1xf32, #tpu.memory_space<vmem>>, vector<36x1xf32>
    %1 = vector.shape_cast %0 : vector<36x1xf32> to vector<36x1xf32>
    %2 = vector.broadcast %1 : vector<36x1xf32> to vector<36x128xf32>
    %c0_1 = arith.constant 0 : index
    %c0_2 = arith.constant 0 : index
    %3 = vector.load %arg1[%c0_1, %c0_2] : memref<36x128xf32, #tpu.memory_space<vmem>>, vector<36x128xf32>
    %c0_3 = arith.constant 0 : index
    %c0_4 = arith.constant 0 : index
    %4 = vector.load %arg2[%c0_3, %c0_4] : memref<16x64xf32, #tpu.memory_space<vmem>>, vector<16x64xf32>
    %c0_5 = arith.constant 0 : index
    %c0_6 = arith.constant 0 : index
    %5 = vector.load %arg3[%c0_5, %c0_6] : memref<384x128xbf16, #tpu.memory_space<vmem>>, vector<384x128xbf16>
    %c0_7 = arith.constant 0 : index
    %c0_8 = arith.constant 0 : index
    %c0_9 = arith.constant 0 : index
    %6 = vector.load %arg5[%c0_7, %c0_8, %c0_9] : memref<5x1x128xf32, #tpu.memory_space<vmem>>, vector<1x1x128xf32>
    %7 = vector.shape_cast %6 : vector<1x1x128xf32> to vector<1x128xf32>
    %cst = arith.constant 0.000000e+00 : f32
    %8 = vector.broadcast %cst : f32 to vector<1x128xf32>
    %9 = tpu.concatenate %8, %3, %8 in 0 : vector<1x128xf32>, vector<36x128xf32>, vector<1x128xf32> -> vector<38x128xf32>
    %10 = vector.extract_strided_slice %9 {offsets = [0, 0], sizes = [36, 128], strides = [1, 1]} : vector<38x128xf32> to vector<36x128xf32>
    %11 = vector.extract_strided_slice %9 {offsets = [2, 0], sizes = [36, 128], strides = [1, 1]} : vector<38x128xf32> to vector<36x128xf32>
    %12 = tpu.concatenate %10, %3, %11 in 1 : vector<36x128xf32>, vector<36x128xf32>, vector<36x128xf32> -> vector<36x384xf32>
    %13 = arith.truncf %12 : vector<36x384xf32> to vector<36x384xbf16>
    %cst_10 = arith.constant dense<0.000000e+00> : vector<36x128xf32>
    %14 = tpu.matmul %13, %5, %cst_10 {dimension_numbers = #tpu.dot_dimension_numbers<[1], [0], [0], [1], [0, 0, 1, 1], [], []>} : vector<36x384xbf16>, vector<384x128xbf16>, vector<36x128xf32> -> vector<36x128xf32>
    %15 = vector.broadcast %7 : vector<1x128xf32> to vector<36x128xf32>
    %16 = arith.addf %15, %14 : vector<36x128xf32>
    %17 = arith.mulf %16, %2 : vector<36x128xf32>
    %c0_11 = arith.constant 0 : index
    %c0_12 = arith.constant 0 : index
    %c0_13 = arith.constant 0 : index
    %18 = vector.load %arg4[%c0_11, %c0_12, %c0_13] : memref<4x384x128xbf16, #tpu.memory_space<vmem>>, vector<1x384x128xbf16>
    %19 = vector.shape_cast %18 : vector<1x384x128xbf16> to vector<384x128xbf16>
    %c1 = arith.constant 1 : index
    %c0_14 = arith.constant 0 : index
    %c0_15 = arith.constant 0 : index
    %20 = vector.load %arg5[%c1, %c0_14, %c0_15] : memref<5x1x128xf32, #tpu.memory_space<vmem>>, vector<1x1x128xf32>
    %21 = vector.shape_cast %20 : vector<1x1x128xf32> to vector<1x128xf32>
    %cst_16 = arith.constant 0.000000e+00 : f32
    %22 = vector.broadcast %cst_16 : f32 to vector<36x128xf32>
    %23 = arith.maximumf %17, %22 : vector<36x128xf32>
    %cst_17 = arith.constant 0.000000e+00 : f32
    %24 = vector.broadcast %cst_17 : f32 to vector<1x128xf32>
    %25 = tpu.concatenate %24, %23, %24 in 0 : vector<1x128xf32>, vector<36x128xf32>, vector<1x128xf32> -> vector<38x128xf32>
    %26 = vector.extract_strided_slice %25 {offsets = [0, 0], sizes = [36, 128], strides = [1, 1]} : vector<38x128xf32> to vector<36x128xf32>
    %27 = vector.extract_strided_slice %25 {offsets = [2, 0], sizes = [36, 128], strides = [1, 1]} : vector<38x128xf32> to vector<36x128xf32>
    %28 = tpu.concatenate %26, %23, %27 in 1 : vector<36x128xf32>, vector<36x128xf32>, vector<36x128xf32> -> vector<36x384xf32>
    %29 = arith.truncf %28 : vector<36x384xf32> to vector<36x384xbf16>
    %cst_18 = arith.constant dense<0.000000e+00> : vector<36x128xf32>
    %30 = tpu.matmul %29, %19, %cst_18 {dimension_numbers = #tpu.dot_dimension_numbers<[1], [0], [0], [1], [0, 0, 1, 1], [], []>} : vector<36x384xbf16>, vector<384x128xbf16>, vector<36x128xf32> -> vector<36x128xf32>
    %31 = vector.broadcast %21 : vector<1x128xf32> to vector<36x128xf32>
    %32 = arith.addf %31, %30 : vector<36x128xf32>
    %33 = arith.mulf %32, %2 : vector<36x128xf32>
    %c1_19 = arith.constant 1 : index
    %c0_20 = arith.constant 0 : index
    %c0_21 = arith.constant 0 : index
    %34 = vector.load %arg4[%c1_19, %c0_20, %c0_21] : memref<4x384x128xbf16, #tpu.memory_space<vmem>>, vector<1x384x128xbf16>
    %35 = vector.shape_cast %34 : vector<1x384x128xbf16> to vector<384x128xbf16>
    %c2 = arith.constant 2 : index
    %c0_22 = arith.constant 0 : index
    %c0_23 = arith.constant 0 : index
    %36 = vector.load %arg5[%c2, %c0_22, %c0_23] : memref<5x1x128xf32, #tpu.memory_space<vmem>>, vector<1x1x128xf32>
    %37 = vector.shape_cast %36 : vector<1x1x128xf32> to vector<1x128xf32>
    %cst_24 = arith.constant 0.000000e+00 : f32
    %38 = vector.broadcast %cst_24 : f32 to vector<36x128xf32>
    %39 = arith.maximumf %33, %38 : vector<36x128xf32>
    %cst_25 = arith.constant 0.000000e+00 : f32
    %40 = vector.broadcast %cst_25 : f32 to vector<1x128xf32>
    %41 = tpu.concatenate %40, %39, %40 in 0 : vector<1x128xf32>, vector<36x128xf32>, vector<1x128xf32> -> vector<38x128xf32>
    %42 = vector.extract_strided_slice %41 {offsets = [0, 0], sizes = [36, 128], strides = [1, 1]} : vector<38x128xf32> to vector<36x128xf32>
    %43 = vector.extract_strided_slice %41 {offsets = [2, 0], sizes = [36, 128], strides = [1, 1]} : vector<38x128xf32> to vector<36x128xf32>
    %44 = tpu.concatenate %42, %39, %43 in 1 : vector<36x128xf32>, vector<36x128xf32>, vector<36x128xf32> -> vector<36x384xf32>
    %45 = arith.truncf %44 : vector<36x384xf32> to vector<36x384xbf16>
    %cst_26 = arith.constant dense<0.000000e+00> : vector<36x128xf32>
    %46 = tpu.matmul %45, %35, %cst_26 {dimension_numbers = #tpu.dot_dimension_numbers<[1], [0], [0], [1], [0, 0, 1, 1], [], []>} : vector<36x384xbf16>, vector<384x128xbf16>, vector<36x128xf32> -> vector<36x128xf32>
    %47 = vector.broadcast %37 : vector<1x128xf32> to vector<36x128xf32>
    %48 = arith.addf %47, %46 : vector<36x128xf32>
    %49 = arith.mulf %48, %2 : vector<36x128xf32>
    %50 = arith.addf %17, %49 : vector<36x128xf32>
    %c0_27 = arith.constant 0 : index
    %c0_28 = arith.constant 0 : index
    %51 = vector.load %arg7[%c0_27, %c0_28] : memref<36x16xbf16, #tpu.memory_space<vmem>>, vector<36x16xbf16>
    %52 = arith.truncf %4 : vector<16x64xf32> to vector<16x64xbf16>
    %cst_29 = arith.constant dense<0.000000e+00> : vector<36x64xf32>
    %53 = tpu.matmul %51, %52, %cst_29 {dimension_numbers = #tpu.dot_dimension_numbers<[1], [0], [0], [1], [0, 0, 1, 1], [], []>} : vector<36x16xbf16>, vector<16x64xbf16>, vector<36x64xf32> -> vector<36x64xf32>
    %54 = arith.truncf %53 : vector<36x64xf32> to vector<36x64xbf16>
    %c0_30 = arith.constant 0 : index
    %c0_31 = arith.constant 0 : index
    %55 = vector.load %arg8[%c0_30, %c0_31] : memref<64x128xbf16, #tpu.memory_space<vmem>>, vector<64x128xbf16>
    %cst_32 = arith.constant dense<0.000000e+00> : vector<36x128xf32>
    %56 = tpu.matmul %54, %55, %cst_32 {dimension_numbers = #tpu.dot_dimension_numbers<[1], [0], [0], [1], [0, 0, 1, 1], [], []>} : vector<36x64xbf16>, vector<64x128xbf16>, vector<36x128xf32> -> vector<36x128xf32>
    %57 = arith.addf %50, %56 : vector<36x128xf32>
    %c2_33 = arith.constant 2 : index
    %c0_34 = arith.constant 0 : index
    %c0_35 = arith.constant 0 : index
    %58 = vector.load %arg4[%c2_33, %c0_34, %c0_35] : memref<4x384x128xbf16, #tpu.memory_space<vmem>>, vector<1x384x128xbf16>
    %59 = vector.shape_cast %58 : vector<1x384x128xbf16> to vector<384x128xbf16>
    %c3 = arith.constant 3 : index
    %c0_36 = arith.constant 0 : index
    %c0_37 = arith.constant 0 : index
    %60 = vector.load %arg5[%c3, %c0_36, %c0_37] : memref<5x1x128xf32, #tpu.memory_space<vmem>>, vector<1x1x128xf32>
    %61 = vector.shape_cast %60 : vector<1x1x128xf32> to vector<1x128xf32>
    %cst_38 = arith.constant 0.000000e+00 : f32
    %62 = vector.broadcast %cst_38 : f32 to vector<36x128xf32>
    %63 = arith.maximumf %57, %62 : vector<36x128xf32>
    %cst_39 = arith.constant 0.000000e+00 : f32
    %64 = vector.broadcast %cst_39 : f32 to vector<1x128xf32>
    %65 = tpu.concatenate %64, %63, %64 in 0 : vector<1x128xf32>, vector<36x128xf32>, vector<1x128xf32> -> vector<38x128xf32>
    %66 = vector.extract_strided_slice %65 {offsets = [0, 0], sizes = [36, 128], strides = [1, 1]} : vector<38x128xf32> to vector<36x128xf32>
    %67 = vector.extract_strided_slice %65 {offsets = [2, 0], sizes = [36, 128], strides = [1, 1]} : vector<38x128xf32> to vector<36x128xf32>
    %68 = tpu.concatenate %66, %63, %67 in 1 : vector<36x128xf32>, vector<36x128xf32>, vector<36x128xf32> -> vector<36x384xf32>
    %69 = arith.truncf %68 : vector<36x384xf32> to vector<36x384xbf16>
    %cst_40 = arith.constant dense<0.000000e+00> : vector<36x128xf32>
    %70 = tpu.matmul %69, %59, %cst_40 {dimension_numbers = #tpu.dot_dimension_numbers<[1], [0], [0], [1], [0, 0, 1, 1], [], []>} : vector<36x384xbf16>, vector<384x128xbf16>, vector<36x128xf32> -> vector<36x128xf32>
    %71 = vector.broadcast %61 : vector<1x128xf32> to vector<36x128xf32>
    %72 = arith.addf %71, %70 : vector<36x128xf32>
    %73 = arith.mulf %72, %2 : vector<36x128xf32>
    %c3_41 = arith.constant 3 : index
    %c0_42 = arith.constant 0 : index
    %c0_43 = arith.constant 0 : index
    %74 = vector.load %arg4[%c3_41, %c0_42, %c0_43] : memref<4x384x128xbf16, #tpu.memory_space<vmem>>, vector<1x384x128xbf16>
    %75 = vector.shape_cast %74 : vector<1x384x128xbf16> to vector<384x128xbf16>
    %c4 = arith.constant 4 : index
    %c0_44 = arith.constant 0 : index
    %c0_45 = arith.constant 0 : index
    %76 = vector.load %arg5[%c4, %c0_44, %c0_45] : memref<5x1x128xf32, #tpu.memory_space<vmem>>, vector<1x1x128xf32>
    %77 = vector.shape_cast %76 : vector<1x1x128xf32> to vector<1x128xf32>
    %cst_46 = arith.constant 0.000000e+00 : f32
    %78 = vector.broadcast %cst_46 : f32 to vector<36x128xf32>
    %79 = arith.maximumf %73, %78 : vector<36x128xf32>
    %cst_47 = arith.constant 0.000000e+00 : f32
    %80 = vector.broadcast %cst_47 : f32 to vector<1x128xf32>
    %81 = tpu.concatenate %80, %79, %80 in 0 : vector<1x128xf32>, vector<36x128xf32>, vector<1x128xf32> -> vector<38x128xf32>
    %82 = vector.extract_strided_slice %81 {offsets = [0, 0], sizes = [36, 128], strides = [1, 1]} : vector<38x128xf32> to vector<36x128xf32>
    %83 = vector.extract_strided_slice %81 {offsets = [2, 0], sizes = [36, 128], strides = [1, 1]} : vector<38x128xf32> to vector<36x128xf32>
    %84 = tpu.concatenate %82, %79, %83 in 1 : vector<36x128xf32>, vector<36x128xf32>, vector<36x128xf32> -> vector<36x384xf32>
    %85 = arith.truncf %84 : vector<36x384xf32> to vector<36x384xbf16>
    %cst_48 = arith.constant dense<0.000000e+00> : vector<36x128xf32>
    %86 = tpu.matmul %85, %75, %cst_48 {dimension_numbers = #tpu.dot_dimension_numbers<[1], [0], [0], [1], [0, 0, 1, 1], [], []>} : vector<36x384xbf16>, vector<384x128xbf16>, vector<36x128xf32> -> vector<36x128xf32>
    %87 = vector.broadcast %77 : vector<1x128xf32> to vector<36x128xf32>
    %88 = arith.addf %87, %86 : vector<36x128xf32>
    %89 = arith.mulf %88, %2 : vector<36x128xf32>
    %90 = arith.addf %57, %89 : vector<36x128xf32>
    %c0_49 = arith.constant 0 : index
    %c0_50 = arith.constant 0 : index
    %91 = vector.load %arg9[%c0_49, %c0_50] : memref<36x128xf32, #tpu.memory_space<vmem>>, vector<36x128xf32>
    tpu.vector_store %arg9[%c0_49, %c0_50], %90 {strides = array<i32>} : memref<36x128xf32, #tpu.memory_space<vmem>>, vector<36x128xf32>,
    return
  }
  func.func @transform_0(%arg0: i32) -> (i32, i32) {
    %c0_i32 = arith.constant 0 : i32
    %c0_i32_0 = arith.constant 0 : i32
    %c0_i32_1 = arith.constant 0 : i32
    return %c0_i32, %c0_i32_0 : i32, i32
  }
  func.func @transform_1(%arg0: i32) -> (i32, i32) {
    %c0_i32 = arith.constant 0 : i32
    %c0_i32_0 = arith.constant 0 : i32
    %c0_i32_1 = arith.constant 0 : i32
    return %c0_i32, %c0_i32_0 : i32, i32
  }
  func.func @transform_2(%arg0: i32) -> (i32, i32) {
    %c0_i32 = arith.constant 0 : i32
    %c0_i32_0 = arith.constant 0 : i32
    %c0_i32_1 = arith.constant 0 : i32
    return %c0_i32, %c0_i32_0 : i32, i32
  }
  func.func @transform_3(%arg0: i32) -> (i32, i32, i32) {
    %c0_i32 = arith.constant 0 : i32
    %c0_i32_0 = arith.constant 0 : i32
    %c0_i32_1 = arith.constant 0 : i32
    %c0_i32_2 = arith.constant 0 : i32
    return %c0_i32, %c0_i32_0, %c0_i32_1 : i32, i32, i32
  }
  func.func @transform_4(%arg0: i32) -> (i32, i32, i32) {
    %c0_i32 = arith.constant 0 : i32
    %c0_i32_0 = arith.constant 0 : i32
    %c0_i32_1 = arith.constant 0 : i32
    %c0_i32_2 = arith.constant 0 : i32
    return %c0_i32, %c0_i32_0, %c0_i32_1 : i32, i32, i32
  }
  func.func @transform_5(%arg0: i32) -> (i32, i32) {
    %c0_i32 = arith.constant 0 : i32
    %c0_i32_0 = arith.constant 0 : i32
    %c0_i32_1 = arith.constant 0 : i32
    return %c0_i32, %c0_i32_0 : i32, i32
  }
  func.func @transform_6(%arg0: i32) -> (i32, i32) {
    %c0_i32 = arith.constant 0 : i32
    %c0_i32_0 = arith.constant 0 : i32
    %c0_i32_1 = arith.constant 0 : i32
    return %c0_i32, %c0_i32_0 : i32, i32
  }
  func.func @transform_7(%arg0: i32) -> (i32, i32) {
    %c0_i32 = arith.constant 0 : i32
    %c0_i32_0 = arith.constant 0 : i32
    %c0_i32_1 = arith.constant 0 : i32
    return %c0_i32, %c0_i32_0 : i32, i32
  }
  func.func @transform_8(%arg0: i32) -> (i32, i32) {
    %c0_i32 = arith.constant 0 : i32
    %c0_i32_0 = arith.constant 0 : i32
    %c0_i32_1 = arith.constant 0 : i32
    return %c0_i32, %c0_i32_0 : i32, i32
  }
}

</mosaic_0001>

<llo_original>
// kernel: tpu_custom_call.1
$region0: #{tpu_custom_call.1}
  #allocation0 [shape = 'u32[]', space=smem, size = 0x4, offset = 0x4, fixed_abs, tag = 'smem constant byte address 0x4 - core index']
  #allocation1 [shape = 'u32[144,128]{1,0:T(1,128)}', space=vmem, size = 0x12000, scoped, tag = 'internal scratch']
  %s0 = inlined_call_operand.vmem [shape: f32[36,128], index: 0, kind: input, shape index: {}]
  %s1 = inlined_call_operand.hbm [shape: f32[16,64], index: 1, kind: input, shape index: {}]
  %s2 = inlined_call_operand.hbm [shape: bf16[384,128], index: 2, kind: input, shape index: {}]
  %s3 = inlined_call_operand.hbm [shape: bf16[4,384,128], index: 3, kind: input, shape index: {}]
  %s4 = inlined_call_operand.hbm [shape: f32[5,1,128], index: 4, kind: input, shape index: {}]
  %s5 = inlined_call_operand.vmem [shape: f32[36,1], index: 5, kind: input, shape index: {}]
  %s6 = inlined_call_operand.vmem [shape: bf16[36,16], index: 6, kind: input, shape index: {}]
  %s7 = inlined_call_operand.vmem [shape: bf16[64,128], index: 7, kind: input, shape index: {}]
  %s8 = inlined_call_operand.hbm [shape: f32[36,128], index: 8, kind: output, shape index: {}]
  %s9 = sld [smem:[#allocation0]]
  $region58: #{tpu_custom_call.1} parent=0
    _
  %s11 = ssub.s32 1, %s9
  %s12 = scalar_select 0, %s11, %s9
  $region1: #{tpu_custom_call.1} parent=0
    #allocation2 [shape = 'u8[8192]{0}', space=vmem, size = 0x2000, scoped, tag = 'input window, operand 1, single buffered']
    #allocation3 [shape = 's32[1]{0}', space=sflag, size = 0x4, scoped, tag = 'scoped memory for tpu_custom_call.1']
    #allocation4 [shape = 's32[1]{0}', space=sflag, size = 0x4, scoped, tag = 'scoped memory for tpu_custom_call.1']
    #allocation5 [shape = 'u8[98304]{0}', space=vmem, size = 0x18000, scoped, tag = 'input window, operand 2, single buffered']
    #allocation6 [shape = 's32[1]{0}', space=sflag, size = 0x4, scoped, tag = 'scoped memory for tpu_custom_call.1']
    #allocation7 [shape = 'u8[393216]{0}', space=vmem, size = 0x60000, scoped, tag = 'input window, operand 3, single buffered']
    #allocation8 [shape = 'u8[2560]{0}', space=vmem, size = 0xc00, scoped, tag = 'input window, operand 4, single buffered']
    #allocation9 [shape = 's32[1]{0}', space=sflag, size = 0x4, scoped, tag = 'scoped memory for tpu_custom_call.1']
    #allocation10 [shape = 'u8[20480]{0}', space=vmem, size = 0x5000, scoped, tag = 'output window, operand 0, single buffered']
    %13 = vsyncpa [#allocation3], 0
    %14 = vsyncpa [#allocation6], 0
    %15 = vsyncpa [#allocation9], 0
    %16 = vsyncpa [#allocation4], 0
    // Predicated region
    $region2: #{tpu_custom_call.1} parent=1 // pred_check
      _
    $region3: #{tpu_custom_call.1} parent=1 // pred_check_branch
      %18 = sbr.rel (0) target = $region5
    $region4: #{tpu_custom_call.1} parent=1 // pred_region
      _
    $region5: #{tpu_custom_call.1} parent=1 // pred_fallthru
      _
    // Predicated region
    $region6: #{tpu_custom_call.1} parent=1 // pred_check
      _
    $region7: #{tpu_custom_call.1} parent=1 // pred_check_branch
      %20 = sbr.rel (0) target = $region9
    $region8: #{tpu_custom_call.1} parent=1 // pred_region
      %s22 = ssub.s32 256, 256
      %23 = vsyncadd [#allocation3], %s22
      %s24 = sshll.u32 [#allocation2], 4
      %s25 = int_to_ptr.vmem [resolvable:$true] %s24
      %30 = dma.hbm_to_vmem [thread:$0]  %s1, 256, %s25, [#allocation3], 128, 128, 8
    $region9: #{tpu_custom_call.1} parent=1 // pred_fallthru
      _
    // Predicated region
    $region10: #{tpu_custom_call.1} parent=1 // pred_check
      _
    $region11: #{tpu_custom_call.1} parent=1 // pred_check_branch
      %32 = sbr.rel (0) target = $region13
    $region12: #{tpu_custom_call.1} parent=1 // pred_region
      %s34 = ssub.s32 3072, 3072
      %35 = vsyncadd [#allocation6], %s34
      %s36 = sshll.u32 [#allocation5], 4
      %s37 = int_to_ptr.vmem [resolvable:$true] %s36
      %42 = dma.hbm_to_vmem [thread:$0]  %s2, 3072, %s37, [#allocation6], 64, 64, 4
    $region13: #{tpu_custom_call.1} parent=1 // pred_fallthru
      _
    // Predicated region
    $region14: #{tpu_custom_call.1} parent=1 // pred_check
      _
    $region15: #{tpu_custom_call.1} parent=1 // pred_check_branch
      %44 = sbr.rel (0) target = $region17
    $region16: #{tpu_custom_call.1} parent=1 // pred_region
      %s46 = ssub.s32 12288, 12288
      %47 = vsyncadd [#allocation6], %s46
      %s48 = sshll.u32 [#allocation7], 4
      %s49 = int_to_ptr.vmem [resolvable:$true] %s48
      %54 = dma.hbm_to_vmem [thread:$0]  %s3, 12288, %s49, [#allocation6], 64, 64, 4
    $region17: #{tpu_custom_call.1} parent=1 // pred_fallthru
      _
    // Predicated region
    $region18: #{tpu_custom_call.1} parent=1 // pred_check
      _
    $region19: #{tpu_custom_call.1} parent=1 // pred_check_branch
      %56 = sbr.rel (0) target = $region21
    $region20: #{tpu_custom_call.1} parent=1 // pred_region
      %s58 = ssub.s32 80, 80
      %59 = vsyncadd [#allocation9], %s58
      %s60 = sshll.u32 [#allocation8], 4
      %s61 = int_to_ptr.vmem [resolvable:$true] %s60
      %66 = dma.hbm_to_vmem [thread:$0]  %s4, 80, %s61, [#allocation9], 16, 16, 1
    $region21: #{tpu_custom_call.1} parent=1 // pred_fallthru
      _
    // Predicated region
    $region22: #{tpu_custom_call.1} parent=1 // pred_check
      _
    $region23: #{tpu_custom_call.1} parent=1 // pred_check_branch
      %68 = sbr.rel (0) target = $region25
    $region24: #{tpu_custom_call.1} parent=1 // pred_region
      _
    $region25: #{tpu_custom_call.1} parent=1 // pred_fallthru
      _
    // Predicated region
    $region26: #{tpu_custom_call.1} parent=1 // pred_check
      _
    $region27: #{tpu_custom_call.1} parent=1 // pred_check_branch
      %70 = sbr.rel (0) target = $region29
    $region28: #{tpu_custom_call.1} parent=1 // pred_region
      _
    $region29: #{tpu_custom_call.1} parent=1 // pred_fallthru
      _
    // Predicated region
    $region30: #{tpu_custom_call.1} parent=1 // pred_check
      _
    $region31: #{tpu_custom_call.1} parent=1 // pred_check_branch
      %72 = sbr.rel (0) target = $region33
    $region32: #{tpu_custom_call.1} parent=1 // pred_region
      _
    $region33: #{tpu_custom_call.1} parent=1 // pred_fallthru
      _
    // Predicated region
    $region34: #{tpu_custom_call.1} parent=1 // pred_check
      _
    $region35: #{tpu_custom_call.1} parent=1 // pred_check_branch
      %74 = sbr.rel (0) target = $region37
    $region36: #{tpu_custom_call.1} parent=1 // pred_region
      %75 = dma.done [#allocation3], 256
    $region37: #{tpu_custom_call.1} parent=1 // pred_fallthru
      _
    // Predicated region
    $region38: #{tpu_custom_call.1} parent=1 // pred_check
      _
    $region39: #{tpu_custom_call.1} parent=1 // pred_check_branch
      %77 = sbr.rel (0) target = $region41
    $region40: #{tpu_custom_call.1} parent=1 // pred_region
      %78 = dma.done [#allocation6], 3072
    $region41: #{tpu_custom_call.1} parent=1 // pred_fallthru
      _
    // Predicated region
    $region42: #{tpu_custom_call.1} parent=1 // pred_check
      _
    $region43: #{tpu_custom_call.1} parent=1 // pred_check_branch
      %80 = sbr.rel (0) target = $region45
    $region44: #{tpu_custom_call.1} parent=1 // pred_region
      %81 = dma.done [#allocation6], 12288
    $region45: #{tpu_custom_call.1} parent=1 // pred_fallthru
      _
    // Predicated region
    $region46: #{tpu_custom_call.1} parent=1 // pred_check
      _
    $region47: #{tpu_custom_call.1} parent=1 // pred_check_branch
      %83 = sbr.rel (0) target = $region49
    $region48: #{tpu_custom_call.1} parent=1 // pred_region
      %84 = dma.done [#allocation9], 80
    $region49: #{tpu_custom_call.1} parent=1 // pred_fallthru
      _
    %v86 = vld [vmem:[%s5] sm:$0xff]
    %v87 = vld [vmem:[%s5 + $0x8] sm:$0xff]
    %v88 = vld [vmem:[%s5 + $0x10] sm:$0xff]
    %v89 = vld [vmem:[%s5 + $0x18] sm:$0xff]
    %v90 = vld [vmem:[%s5 + $0x20] sm:$0xf]
    %92 = vset.pattern.permute.xlu0 0
    %93 = vperm.xlu0 %92, %v86
    %v94 = vpop.permute.xlu0 %93
    %97 = vset.pattern.permute.xlu0 0
    %98 = vperm.xlu0 %97, %v87
    %v99 = vpop.permute.xlu0 %98
    %102 = vset.pattern.permute.xlu0 0
    %103 = vperm.xlu0 %102, %v88
    %v104 = vpop.permute.xlu0 %103
    %107 = vset.pattern.permute.xlu0 0
    %108 = vperm.xlu0 %107, %v89
    %v109 = vpop.permute.xlu0 %108
    %112 = vset.pattern.permute.xlu0 0
    %113 = vperm.xlu0 %112, %v90
    %v114 = vpop.permute.xlu0 %113
    %v116 = vld [vmem:[%s0] sm:$0xff]
    %v117 = vld [vmem:[%s0 + $0x8] sm:$0xff]
    %v118 = vld [vmem:[%s0 + $0x10] sm:$0xff]
    %v119 = vld [vmem:[%s0 + $0x18] sm:$0xff]
    %v120 = vld [vmem:[%s0 + $0x20] sm:$0xf]
    %v121 = vld [vmem:[#allocation2] sm:$0xff]
    %v122 = vld [vmem:[#allocation2 + $0x8] sm:$0xff]
    %v123 = vld [vmem:[#allocation5] sm:$0xf]
    %v124 = vld [vmem:[#allocation5 + $0x4] sm:$0xf]
    %v125 = vld [vmem:[#allocation5 + $0x8] sm:$0xf]
    %v126 = vld [vmem:[#allocation5 + $0xc] sm:$0xf]
    %v127 = vld [vmem:[#allocation5 + $0x10] sm:$0xf]
    %v128 = vld [vmem:[#allocation5 + $0x14] sm:$0xf]
    %v129 = vld [vmem:[#allocation5 + $0x18] sm:$0xf]
    %v130 = vld [vmem:[#allocation5 + $0x1c] sm:$0xf]
    %v131 = vld [vmem:[#allocation5 + $0x20] sm:$0xf]
    %v132 = vld [vmem:[#allocation5 + $0x24] sm:$0xf]
    %v133 = vld [vmem:[#allocation5 + $0x28] sm:$0xf]
    %v134 = vld [vmem:[#allocation5 + $0x2c] sm:$0xf]
    %v135 = vld [vmem:[#allocation5 + $0x30] sm:$0xf]
    %v136 = vld [vmem:[#allocation5 + $0x34] sm:$0xf]
    %v137 = vld [vmem:[#allocation5 + $0x38] sm:$0xf]
    %v138 = vld [vmem:[#allocation5 + $0x3c] sm:$0xf]
    %v139 = vld [vmem:[#allocation5 + $0x40] sm:$0xf]
    %v140 = vld [vmem:[#allocation5 + $0x44] sm:$0xf]
    %v141 = vld [vmem:[#allocation5 + $0x48] sm:$0xf]
    %v142 = vld [vmem:[#allocation5 + $0x4c] sm:$0xf]
    %v143 = vld [vmem:[#allocation5 + $0x50] sm:$0xf]
    %v144 = vld [vmem:[#allocation5 + $0x54] sm:$0xf]
    %v145 = vld [vmem:[#allocation5 + $0x58] sm:$0xf]
    %v146 = vld [vmem:[#allocation5 + $0x5c] sm:$0xf]
    %v147 = vld [vmem:[#allocation5 + $0x60] sm:$0xf]
    %v148 = vld [vmem:[#allocation5 + $0x64] sm:$0xf]
    %v149 = vld [vmem:[#allocation5 + $0x68] sm:$0xf]
    %v150 = vld [vmem:[#allocation5 + $0x6c] sm:$0xf]
    %v151 = vld [vmem:[#allocation5 + $0x70] sm:$0xf]
    %v152 = vld [vmem:[#allocation5 + $0x74] sm:$0xf]
    %v153 = vld [vmem:[#allocation5 + $0x78] sm:$0xf]
    %v154 = vld [vmem:[#allocation5 + $0x7c] sm:$0xf]
    %v155 = vld [vmem:[#allocation5 + $0x80] sm:$0xf]
    %v156 = vld [vmem:[#allocation5 + $0x84] sm:$0xf]
    %v157 = vld [vmem:[#allocation5 + $0x88] sm:$0xf]
    %v158 = vld [vmem:[#allocation5 + $0x8c] sm:$0xf]
    %v159 = vld [vmem:[#allocation5 + $0x90] sm:$0xf]
    %v160 = vld [vmem:[#allocation5 + $0x94] sm:$0xf]
    %v161 = vld [vmem:[#allocation5 + $0x98] sm:$0xf]
    %v162 = vld [vmem:[#allocation5 + $0x9c] sm:$0xf]
    %v163 = vld [vmem:[#allocation5 + $0xa0] sm:$0xf]
    %v164 = vld [vmem:[#allocation5 + $0xa4] sm:$0xf]
    %v165 = vld [vmem:[#allocation5 + $0xa8] sm:$0xf]
    %v166 = vld [vmem:[#allocation5 + $0xac] sm:$0xf]
    %v167 = vld [vmem:[#allocation5 + $0xb0] sm:$0xf]
    %v168 = vld [vmem:[#allocation5 + $0xb4] sm:$0xf]
    %v169 = vld [vmem:[#allocation5 + $0xb8] sm:$0xf]
    %v170 = vld [vmem:[#allocation5 + $0xbc] sm:$0xf]
    %v171 = vld [vmem:[#allocation8] sm:$0x1]
    %vm177 = vcmask 1040384
    %v178 = vrot.slane %v116, 7
    %v179 = vrot.slane %v117, 7
    %v180 = vsel %vm177, %v178, %v179
    %v181 = vrot.slane %v118, 7
    %v182 = vsel %vm177, %v179, %v181
    %v183 = vrot.slane %v119, 7
    %v184 = vsel %vm177, %v181, %v183
    %v185 = vrot.slane %v120, 7
    %v186 = vsel %vm177, %v183, %v185
    %v192 = vsel %vm177, 0.0, %v178
    %vm193 = vcmask 1044480
    %v194 = vsel %vm193, %v186, 0.0
    %vm197 = vcmask 1045504
    %v198 = vrot.slane %v192, 2
    %v199 = vrot.slane %v180, 2
    %v200 = vsel %vm197, %v198, %v199
    %v201 = vrot.slane %v182, 2
    %v202 = vsel %vm197, %v199, %v201
    %v203 = vrot.slane %v184, 2
    %v204 = vsel %vm197, %v201, %v203
    %v205 = vrot.slane %v194, 2
    %v206 = vsel %vm197, %v203, %v205
    %v212 = vpack.c.bf16 %v180, %v192
    %v213 = vpack.c.bf16 %v117, %v116
    %v214 = vpack.c.bf16 %v202, %v200
    %v215 = vpack.c.bf16 %v184, %v182
    %v216 = vpack.c.bf16 %v119, %v118
    %v217 = vpack.c.bf16 %v206, %v204
    %v218 = vpack.c.bf16 %v194, %v194
    %v219 = vpack.c.bf16 %v120, %v120
    %v220 = vpack.c.bf16 %v205, %v205
    %v269 = vunpack.c.l.b16 %v123
    %v270 = vunpack.c.l.b16 %v124
    %v271 = vunpack.c.l.b16 %v125
    %v272 = vunpack.c.l.b16 %v126
    %v273 = vunpack.c.l.b16 %v127
    %v274 = vunpack.c.l.b16 %v128
    %v275 = vunpack.c.l.b16 %v129
    %v276 = vunpack.c.l.b16 %v130
    %v277 = vunpack.c.l.b16 %v131
    %v278 = vunpack.c.l.b16 %v132
    %v279 = vunpack.c.l.b16 %v133
    %v280 = vunpack.c.l.b16 %v134
    %v281 = vunpack.c.l.b16 %v135
    %v282 = vunpack.c.l.b16 %v136
    %v283 = vunpack.c.l.b16 %v137
    %v284 = vunpack.c.l.b16 %v138
    %v285 = vunpack.c.l.b16 %v139
    %v286 = vunpack.c.l.b16 %v140
    %v287 = vunpack.c.l.b16 %v141
    %v288 = vunpack.c.l.b16 %v142
    %v289 = vunpack.c.l.b16 %v143
    %v290 = vunpack.c.l.b16 %v144
    %v291 = vunpack.c.l.b16 %v145
    %v292 = vunpack.c.l.b16 %v146
    %v293 = vunpack.c.l.b16 %v147
    %v294 = vunpack.c.l.b16 %v148
    %v295 = vunpack.c.l.b16 %v149
    %v296 = vunpack.c.l.b16 %v150
    %v297 = vunpack.c.l.b16 %v151
    %v298 = vunpack.c.l.b16 %v152
    %v299 = vunpack.c.l.b16 %v153
    %v300 = vunpack.c.l.b16 %v154
    %v301 = vunpack.c.l.b16 %v155
    %v302 = vunpack.c.l.b16 %v156
    %v303 = vunpack.c.l.b16 %v157
    %v304 = vunpack.c.l.b16 %v158
    %v305 = vunpack.c.l.b16 %v159
    %v306 = vunpack.c.l.b16 %v160
    %v307 = vunpack.c.l.b16 %v161
    %v308 = vunpack.c.l.b16 %v162
    %v309 = vunpack.c.l.b16 %v163
    %v310 = vunpack.c.l.b16 %v164
    %v311 = vunpack.c.l.b16 %v165
    %v312 = vunpack.c.l.b16 %v166
    %v313 = vunpack.c.l.b16 %v167
    %v314 = vunpack.c.l.b16 %v168
    %v315 = vunpack.c.l.b16 %v169
    %v316 = vunpack.c.l.b16 %v170
    %v317 = vpack.c.b16 %v270, %v269
    %v318 = vpack.c.b16 %v272, %v271
    %v319 = vpack.c.b16 %v274, %v273
    %v320 = vpack.c.b16 %v276, %v275
    %v321 = vpack.c.b16 %v278, %v277
    %v322 = vpack.c.b16 %v280, %v279
    %v323 = vpack.c.b16 %v282, %v281
    %v324 = vpack.c.b16 %v284, %v283
    %v325 = vpack.c.b16 %v286, %v285
    %v326 = vpack.c.b16 %v288, %v287
    %v327 = vpack.c.b16 %v290, %v289
    %v328 = vpack.c.b16 %v292, %v291
    %v329 = vpack.c.b16 %v294, %v293
    %v330 = vpack.c.b16 %v296, %v295
    %v331 = vpack.c.b16 %v298, %v297
    %v332 = vpack.c.b16 %v300, %v299
    %v333 = vpack.c.b16 %v302, %v301
    %v334 = vpack.c.b16 %v304, %v303
    %v335 = vpack.c.b16 %v306, %v305
    %v336 = vpack.c.b16 %v308, %v307
    %v337 = vpack.c.b16 %v310, %v309
    %v338 = vpack.c.b16 %v312, %v311
    %v339 = vpack.c.b16 %v314, %v313
    %v340 = vpack.c.b16 %v316, %v315
    %365 = vmatprep.subr.bf16.mxu0 0
    %366 = vmatpush1.bf16.msra.mxu0 %v317
    %367 = vmatprep.subr.bf16.mxu0 0
    %368 = vmatpush1.bf16.msra.mxu0 %v318
    %369 = vmatprep.subr.bf16.mxu0 0
    %370 = vmatpush1.bf16.msra.mxu0 %v319
    %371 = vmatprep.subr.bf16.mxu0 0
    %372 = vmatpush1.bf16.msra.mxu0 %v320
    %373 = vmatprep.subr.bf16.mxu0 0
    %374 = vmatpush1.bf16.msra.mxu0 %v321
    %375 = vmatprep.subr.bf16.mxu0 0
    %376 = vmatpush1.bf16.msra.mxu0 %v322
    %377 = vmatprep.subr.bf16.mxu0 0
    %378 = vmatpush1.bf16.msra.mxu0 %v323
    %379 = vmatprep.subr.bf16.mxu0 0
    %380 = vmatpush1.bf16.msra.mxu0 %v324
    %381 = vmatprep.subr.bf16.mxu0 0
    %382 = vmatpush1.bf16.msra.mxu0 %v325
    %383 = vmatprep.subr.bf16.mxu0 0
    %384 = vmatpush1.bf16.msra.mxu0 %v326
    %385 = vmatprep.subr.bf16.mxu0 0
    %386 = vmatpush1.bf16.msra.mxu0 %v327
    %387 = vmatprep.subr.bf16.mxu0 0
    %388 = vmatpush1.bf16.msra.mxu0 %v328
    %389 = vmatprep.subr.bf16.mxu0 0
    %390 = vmatpush1.bf16.msra.mxu0 %v329
    %391 = vmatprep.subr.bf16.mxu0 0
    %392 = vmatpush1.bf16.msra.mxu0 %v330
    %393 = vmatprep.subr.bf16.mxu0 0
    %394 = vmatpush1.bf16.msra.mxu0 %v331
    %395 = vmatprep.subr.bf16.mxu0 0
    %396 = vmatpush1.bf16.msra.mxu0 %v332
    %397 = vmatprep.mubr.bf16.mxu0 %v213
    %398 = vmatmul.mubr.bf16.gmra.mrb[0].mxu0 %v212
    %v399 = vpop.f32.mrb[0].mxu0
    %v400 = vadd.f32 0.0, %v399
    %v401 = vpop.f32.mrb[0].mxu0
    %v402 = vpop.f32.mrb[0].mxu0
    %v403 = vadd.f32 0.0, %v402
    %v404 = vpop.f32.mrb[0].mxu0
    %405 = vmatprep.mubr.bf16.mxu0 %v216
    %406 = vmatmul.mubr.bf16.gmra.mrb[0].mxu0 %v215
    %v407 = vpop.f32.mrb[0].mxu0
    %v408 = vadd.f32 0.0, %v407
    %v409 = vpop.f32.mrb[0].mxu0
    %v410 = vpop.f32.mrb[0].mxu0
    %v411 = vadd.f32 0.0, %v410
    %v412 = vpop.f32.mrb[0].mxu0
    %413 = vmatprep.mubr.bf16.mxu0 %v219
    %414 = vmatmul.mubr.bf16.gmra.mrb[0].mxu0 %v218
    %v415 = vpop.f32.mrb[0].mxu0
    %v416 = vadd.f32 0.0, %v415
    %v417 = vpop.f32.mrb[0].mxu0
    %v418 = vpop.f32.mrb[0].mxu0
    %v419 = vpop.f32.mrb[0].mxu0
    %420 = vdwg.mxu0
    %421 = vmatprep.subr.bf16.mxu0 0
    %422 = vmatpush1.bf16.msra.mxu0 %v333
    %423 = vmatprep.subr.bf16.mxu0 0
    %424 = vmatpush1.bf16.msra.mxu0 %v334
    %425 = vmatprep.subr.bf16.mxu0 0
    %426 = vmatpush1.bf16.msra.mxu0 %v335
    %427 = vmatprep.subr.bf16.mxu0 0
    %428 = vmatpush1.bf16.msra.mxu0 %v336
    %429 = vmatprep.subr.bf16.mxu0 0
    %430 = vmatpush1.bf16.msra.mxu0 %v337
    %431 = vmatprep.subr.bf16.mxu0 0
    %432 = vmatpush1.bf16.msra.mxu0 %v338
    %433 = vmatprep.subr.bf16.mxu0 0
    %434 = vmatpush1.bf16.msra.mxu0 %v339
    %435 = vmatprep.subr.bf16.mxu0 0
    %436 = vmatpush1.bf16.msra.mxu0 %v340
    %437 = vmatprep.subr.bf16.mxu0 0
    %438 = vmatpush1.bf16.msra.mxu0 0
    %439 = vmatprep.subr.bf16.mxu0 0
    %440 = vmatpush1.bf16.msra.mxu0 0
    %441 = vmatprep.subr.bf16.mxu0 0
    %442 = vmatpush1.bf16.msra.mxu0 0
    %443 = vmatprep.subr.bf16.mxu0 0
    %444 = vmatpush1.bf16.msra.mxu0 0
    %445 = vmatprep.subr.bf16.mxu0 0
    %446 = vmatpush1.bf16.msra.mxu0 0
    %447 = vmatprep.subr.bf16.mxu0 0
    %448 = vmatpush1.bf16.msra.mxu0 0
    %449 = vmatprep.subr.bf16.mxu0 0
    %450 = vmatpush1.bf16.msra.mxu0 0
    %451 = vmatprep.subr.bf16.mxu0 0
    %452 = vmatpush1.bf16.msra.mxu0 0
    %453 = vmatprep.mubr.bf16.mxu0 0
    %454 = vmatmul.mubr.bf16.gmra.mrb[0].mxu0 %v214
    %v455 = vpop.f32.mrb[0].mxu0
    %v456 = vadd.f32 %v400, %v455
    %v457 = vpop.f32.mrb[0].mxu0
    %v458 = vpop.f32.mrb[0].mxu0
    %v459 = vadd.f32 %v403, %v458
    %v460 = vpop.f32.mrb[0].mxu0
    %461 = vmatprep.mubr.bf16.mxu0 0
    %462 = vmatmul.mubr.bf16.gmra.mrb[0].mxu0 %v217
    %v463 = vpop.f32.mrb[0].mxu0
    %v464 = vadd.f32 %v408, %v463
    %v465 = vpop.f32.mrb[0].mxu0
    %v466 = vpop.f32.mrb[0].mxu0
    %v467 = vadd.f32 %v411, %v466
    %v468 = vpop.f32.mrb[0].mxu0
    %469 = vmatprep.mubr.bf16.mxu0 0
    %470 = vmatmul.mubr.bf16.gmra.mrb[0].mxu0 %v220
    %v471 = vpop.f32.mrb[0].mxu0
    %v472 = vadd.f32 %v416, %v471
    %v473 = vpop.f32.mrb[0].mxu0
    %v474 = vpop.f32.mrb[0].mxu0
    %v475 = vpop.f32.mrb[0].mxu0
    %476 = vdwg.mxu0
    %v478 = vlaneseq
    %v479 = vshrl.u32 %v478, 7
    %v480 = vsub.s32 0, %v479
    %v481 = vrot.slane %v171, %v480
    %v483 = vadd.f32 %v481, %v456
    %v484 = vadd.f32 %v481, %v459
    %v485 = vadd.f32 %v481, %v464
    %v486 = vadd.f32 %v481, %v467
    %v487 = vadd.f32 %v481, %v472
    %v488 = vmul.f32 %v483, %v94
    %v489 = vmul.f32 %v484, %v99
    %v490 = vmul.f32 %v485, %v104
    %v491 = vmul.f32 %v486, %v109
    %v492 = vmul.f32 %v487, %v114
    %v493 = vld [vmem:[#allocation7] sm:$0xf]
    %v494 = vld [vmem:[#allocation7 + $0x4] sm:$0xf]
    %v495 = vld [vmem:[#allocation7 + $0x8] sm:$0xf]
    %v496 = vld [vmem:[#allocation7 + $0xc] sm:$0xf]
    %v497 = vld [vmem:[#allocation7 + $0x10] sm:$0xf]
    %v498 = vld [vmem:[#allocation7 + $0x14] sm:$0xf]
    %v499 = vld [vmem:[#allocation7 + $0x18] sm:$0xf]
    %v500 = vld [vmem:[#allocation7 + $0x1c] sm:$0xf]
    %v501 = vld [vmem:[#allocation7 + $0x20] sm:$0xf]
    %v502 = vld [vmem:[#allocation7 + $0x24] sm:$0xf]
    %v503 = vld [vmem:[#allocation7 + $0x28] sm:$0xf]
    %v504 = vld [vmem:[#allocation7 + $0x2c] sm:$0xf]
    %v505 = vld [vmem:[#allocation7 + $0x30] sm:$0xf]
    %v506 = vld [vmem:[#allocation7 + $0x34] sm:$0xf]
    %v507 = vld [vmem:[#allocation7 + $0x38] sm:$0xf]
    %v508 = vld [vmem:[#allocation7 + $0x3c] sm:$0xf]
    %v509 = vld [vmem:[#allocation7 + $0x40] sm:$0xf]
    %v510 = vld [vmem:[#allocation7 + $0x44] sm:$0xf]
    %v511 = vld [vmem:[#allocation7 + $0x48] sm:$0xf]
    %v512 = vld [vmem:[#allocation7 + $0x4c] sm:$0xf]
    %v513 = vld [vmem:[#allocation7 + $0x50] sm:$0xf]
    %v514 = vld [vmem:[#allocation7 + $0x54] sm:$0xf]
    %v515 = vld [vmem:[#allocation7 + $0x58] sm:$0xf]
    %v516 = vld [vmem:[#allocation7 + $0x5c] sm:$0xf]
    %v517 = vld [vmem:[#allocation7 + $0x60] sm:$0xf]
    %v518 = vld [vmem:[#allocation7 + $0x64] sm:$0xf]
    %v519 = vld [vmem:[#allocation7 + $0x68] sm:$0xf]
    %v520 = vld [vmem:[#allocation7 + $0x6c] sm:$0xf]
    %v521 = vld [vmem:[#allocation7 + $0x70] sm:$0xf]
    %v522 = vld [vmem:[#allocation7 + $0x74] sm:$0xf]
    %v523 = vld [vmem:[#allocation7 + $0x78] sm:$0xf]
    %v524 = vld [vmem:[#allocation7 + $0x7c] sm:$0xf]
    %v525 = vld [vmem:[#allocation7 + $0x80] sm:$0xf]
    %v526 = vld [vmem:[#allocation7 + $0x84] sm:$0xf]
    %v527 = vld [vmem:[#allocation7 + $0x88] sm:$0xf]
    %v528 = vld [vmem:[#allocation7 + $0x8c] sm:$0xf]
    %v529 = vld [vmem:[#allocation7 + $0x90] sm:$0xf]
    %v530 = vld [vmem:[#allocation7 + $0x94] sm:$0xf]
    %v531 = vld [vmem:[#allocation7 + $0x98] sm:$0xf]
    %v532 = vld [vmem:[#allocation7 + $0x9c] sm:$0xf]
    %v533 = vld [vmem:[#allocation7 + $0xa0] sm:$0xf]
    %v534 = vld [vmem:[#allocation7 + $0xa4] sm:$0xf]
    %v535 = vld [vmem:[#allocation7 + $0xa8] sm:$0xf]
    %v536 = vld [vmem:[#allocation7 + $0xac] sm:$0xf]
    %v537 = vld [vmem:[#allocation7 + $0xb0] sm:$0xf]
    %v538 = vld [vmem:[#allocation7 + $0xb4] sm:$0xf]
    %v539 = vld [vmem:[#allocation7 + $0xb8] sm:$0xf]
    %v540 = vld [vmem:[#allocation7 + $0xbc] sm:$0xf]
    %s541 = scalar_lea.vmem [#allocation8], 1
    %v542 = vld [vmem:[%s541] sm:$0x1]
    %v543 = vmax.f32 %v488, 0.0
    %v544 = vmax.f32 %v489, 0.0
    %v545 = vmax.f32 %v490, 0.0
    %v546 = vmax.f32 %v491, 0.0
    %v547 = vmax.f32 %v492, 0.0
    %v553 = vrot.slane %v543, 7
    %v554 = vrot.slane %v544, 7
    %v555 = vsel %vm177, %v553, %v554
    %v556 = vrot.slane %v545, 7
    %v557 = vsel %vm177, %v554, %v556
    %v558 = vrot.slane %v546, 7
    %v559 = vsel %vm177, %v556, %v558
    %v560 = vrot.slane %v547, 7
    %v561 = vsel %vm177, %v558, %v560
    %v567 = vsel %vm177, 0.0, %v553
    %v568 = vsel %vm193, %v561, 0.0
    %v571 = vrot.slane %v567, 2
    %v572 = vrot.slane %v555, 2
    %v573 = vsel %vm197, %v571, %v572
    %v574 = vrot.slane %v557, 2
    %v575 = vsel %vm197, %v572, %v574
    %v576 = vrot.slane %v559, 2
    %v577 = vsel %vm197, %v574, %v576
    %v578 = vrot.slane %v568, 2
    %v579 = vsel %vm197, %v576, %v578
    %v585 = vpack.c.bf16 %v555, %v567
    %v586 = vpack.c.bf16 %v544, %v543
    %v587 = vpack.c.bf16 %v575, %v573
    %v588 = vpack.c.bf16 %v559, %v557
    %v589 = vpack.c.bf16 %v546, %v545
    %v590 = vpack.c.bf16 %v579, %v577
    %v591 = vpack.c.bf16 %v568, %v568
    %v592 = vpack.c.bf16 %v547, %v547
    %v593 = vpack.c.bf16 %v578, %v578
    %v642 = vunpack.c.l.b16 %v493
    %v643 = vunpack.c.l.b16 %v494
    %v644 = vunpack.c.l.b16 %v495
    %v645 = vunpack.c.l.b16 %v496
    %v646 = vunpack.c.l.b16 %v497
    %v647 = vunpack.c.l.b16 %v498
    %v648 = vunpack.c.l.b16 %v499
    %v649 = vunpack.c.l.b16 %v500
    %v650 = vunpack.c.l.b16 %v501
    %v651 = vunpack.c.l.b16 %v502
    %v652 = vunpack.c.l.b16 %v503
    %v653 = vunpack.c.l.b16 %v504
    %v654 = vunpack.c.l.b16 %v505
    %v655 = vunpack.c.l.b16 %v506
    %v656 = vunpack.c.l.b16 %v507
    %v657 = vunpack.c.l.b16 %v508
    %v658 = vunpack.c.l.b16 %v509
    %v659 = vunpack.c.l.b16 %v510
    %v660 = vunpack.c.l.b16 %v511
    %v661 = vunpack.c.l.b16 %v512
    %v662 = vunpack.c.l.b16 %v513
    %v663 = vunpack.c.l.b16 %v514
    %v664 = vunpack.c.l.b16 %v515
    %v665 = vunpack.c.l.b16 %v516
    %v666 = vunpack.c.l.b16 %v517
    %v667 = vunpack.c.l.b16 %v518
    %v668 = vunpack.c.l.b16 %v519
    %v669 = vunpack.c.l.b16 %v520
    %v670 = vunpack.c.l.b16 %v521
    %v671 = vunpack.c.l.b16 %v522
    %v672 = vunpack.c.l.b16 %v523
    %v673 = vunpack.c.l.b16 %v524
    %v674 = vunpack.c.l.b16 %v525
    %v675 = vunpack.c.l.b16 %v526
    %v676 = vunpack.c.l.b16 %v527
    %v677 = vunpack.c.l.b16 %v528
    %v678 = vunpack.c.l.b16 %v529
    %v679 = vunpack.c.l.b16 %v530
    %v680 = vunpack.c.l.b16 %v531
    %v681 = vunpack.c.l.b16 %v532
    %v682 = vunpack.c.l.b16 %v533
    %v683 = vunpack.c.l.b16 %v534
    %v684 = vunpack.c.l.b16 %v535
    %v685 = vunpack.c.l.b16 %v536
    %v686 = vunpack.c.l.b16 %v537
    %v687 = vunpack.c.l.b16 %v538
    %v688 = vunpack.c.l.b16 %v539
    %v689 = vunpack.c.l.b16 %v540
    %v690 = vpack.c.b16 %v643, %v642
    %v691 = vpack.c.b16 %v645, %v644
    %v692 = vpack.c.b16 %v647, %v646
    %v693 = vpack.c.b16 %v649, %v648
    %v694 = vpack.c.b16 %v651, %v650
    %v695 = vpack.c.b16 %v653, %v652
    %v696 = vpack.c.b16 %v655, %v654
    %v697 = vpack.c.b16 %v657, %v656
    %v698 = vpack.c.b16 %v659, %v658
    %v699 = vpack.c.b16 %v661, %v660
    %v700 = vpack.c.b16 %v663, %v662
    %v701 = vpack.c.b16 %v665, %v664
    %v702 = vpack.c.b16 %v667, %v666
    %v703 = vpack.c.b16 %v669, %v668
    %v704 = vpack.c.b16 %v671, %v670
    %v705 = vpack.c.b16 %v673, %v672
    %v706 = vpack.c.b16 %v675, %v674
    %v707 = vpack.c.b16 %v677, %v676
    %v708 = vpack.c.b16 %v679, %v678
    %v709 = vpack.c.b16 %v681, %v680
    %v710 = vpack.c.b16 %v683, %v682
    %v711 = vpack.c.b16 %v685, %v684
    %v712 = vpack.c.b16 %v687, %v686
    %v713 = vpack.c.b16 %v689, %v688
    %738 = vmatprep.subr.bf16.mxu0 0
    %739 = vmatpush1.bf16.msra.mxu0 %v690
    %740 = vmatprep.subr.bf16.mxu0 0
    %741 = vmatpush1.bf16.msra.mxu0 %v691
    %742 = vmatprep.subr.bf16.mxu0 0
    %743 = vmatpush1.bf16.msra.mxu0 %v692
    %744 = vmatprep.subr.bf16.mxu0 0
    %745 = vmatpush1.bf16.msra.mxu0 %v693
    %746 = vmatprep.subr.bf16.mxu0 0
    %747 = vmatpush1.bf16.msra.mxu0 %v694
    %748 = vmatprep.subr.bf16.mxu0 0
    %749 = vmatpush1.bf16.msra.mxu0 %v695
    %750 = vmatprep.subr.bf16.mxu0 0
    %751 = vmatpush1.bf16.msra.mxu0 %v696
    %752 = vmatprep.subr.bf16.mxu0 0
    %753 = vmatpush1.bf16.msra.mxu0 %v697
    %754 = vmatprep.subr.bf16.mxu0 0
    %755 = vmatpush1.bf16.msra.mxu0 %v698
    %756 = vmatprep.subr.bf16.mxu0 0
    %757 = vmatpush1.bf16.msra.mxu0 %v699
    %758 = vmatprep.subr.bf16.mxu0 0
    %759 = vmatpush1.bf16.msra.mxu0 %v700
    %760 = vmatprep.subr.bf16.mxu0 0
    %761 = vmatpush1.bf16.msra.mxu0 %v701
    %762 = vmatprep.subr.bf16.mxu0 0
    %763 = vmatpush1.bf16.msra.mxu0 %v702
    %764 = vmatprep.subr.bf16.mxu0 0
    %765 = vmatpush1.bf16.msra.mxu0 %v703
    %766 = vmatprep.subr.bf16.mxu0 0
    %767 = vmatpush1.bf16.msra.mxu0 %v704
    %768 = vmatprep.subr.bf16.mxu0 0
    %769 = vmatpush1.bf16.msra.mxu0 %v705
    %770 = vmatprep.mubr.bf16.mxu0 %v586
    %771 = vmatmul.mubr.bf16.gmra.mrb[0].mxu0 %v585
    %v772 = vpop.f32.mrb[0].mxu0
    %v773 = vadd.f32 0.0, %v772
    %v774 = vpop.f32.mrb[0].mxu0
    %v775 = vpop.f32.mrb[0].mxu0
    %v776 = vadd.f32 0.0, %v775
    %v777 = vpop.f32.mrb[0].mxu0
    %778 = vmatprep.mubr.bf16.mxu0 %v589
    %779 = vmatmul.mubr.bf16.gmra.mrb[0].mxu0 %v588
    %v780 = vpop.f32.mrb[0].mxu0
    %v781 = vadd.f32 0.0, %v780
    %v782 = vpop.f32.mrb[0].mxu0
    %v783 = vpop.f32.mrb[0].mxu0
    %v784 = vadd.f32 0.0, %v783
    %v785 = vpop.f32.mrb[0].mxu0
    %786 = vmatprep.mubr.bf16.mxu0 %v592
    %787 = vmatmul.mubr.bf16.gmra.mrb[0].mxu0 %v591
    %v788 = vpop.f32.mrb[0].mxu0
    %v789 = vadd.f32 0.0, %v788
    %v790 = vpop.f32.mrb[0].mxu0
    %v791 = vpop.f32.mrb[0].mxu0
    %v792 = vpop.f32.mrb[0].mxu0
    %793 = vdwg.mxu0
    %794 = vmatprep.subr.bf16.mxu0 0
    %795 = vmatpush1.bf16.msra.mxu0 %v706
    %796 = vmatprep.subr.bf16.mxu0 0
    %797 = vmatpush1.bf16.msra.mxu0 %v707
    %798 = vmatprep.subr.bf16.mxu0 0
    %799 = vmatpush1.bf16.msra.mxu0 %v708
    %800 = vmatprep.subr.bf16.mxu0 0
    %801 = vmatpush1.bf16.msra.mxu0 %v709
    %802 = vmatprep.subr.bf16.mxu0 0
    %803 = vmatpush1.bf16.msra.mxu0 %v710
    %804 = vmatprep.subr.bf16.mxu0 0
    %805 = vmatpush1.bf16.msra.mxu0 %v711
    %806 = vmatprep.subr.bf16.mxu0 0
    %807 = vmatpush1.bf16.msra.mxu0 %v712
    %808 = vmatprep.subr.bf16.mxu0 0
    %809 = vmatpush1.bf16.msra.mxu0 %v713
    %810 = vmatprep.subr.bf16.mxu0 0
    %811 = vmatpush1.bf16.msra.mxu0 0
    %812 = vmatprep.subr.bf16.mxu0 0
    %813 = vmatpush1.bf16.msra.mxu0 0
    %814 = vmatprep.subr.bf16.mxu0 0
    %815 = vmatpush1.bf16.msra.mxu0 0
    %816 = vmatprep.subr.bf16.mxu0 0
    %817 = vmatpush1.bf16.msra.mxu0 0
    %818 = vmatprep.subr.bf16.mxu0 0
    %819 = vmatpush1.bf16.msra.mxu0 0
    %820 = vmatprep.subr.bf16.mxu0 0
    %821 = vmatpush1.bf16.msra.mxu0 0
    %822 = vmatprep.subr.bf16.mxu0 0
    %823 = vmatpush1.bf16.msra.mxu0 0
    %824 = vmatprep.subr.bf16.mxu0 0
    %825 = vmatpush1.bf16.msra.mxu0 0
    %826 = vmatprep.mubr.bf16.mxu0 0
    %827 = vmatmul.mubr.bf16.gmra.mrb[0].mxu0 %v587
    %v828 = vpop.f32.mrb[0].mxu0
    %v829 = vadd.f32 %v773, %v828
    %v830 = vpop.f32.mrb[0].mxu0
    %v831 = vpop.f32.mrb[0].mxu0
    %v832 = vadd.f32 %v776, %v831
    %v833 = vpop.f32.mrb[0].mxu0
    %834 = vmatprep.mubr.bf16.mxu0 0
    %835 = vmatmul.mubr.bf16.gmra.mrb[0].mxu0 %v590
    %v836 = vpop.f32.mrb[0].mxu0
    %v837 = vadd.f32 %v781, %v836
    %v838 = vpop.f32.mrb[0].mxu0
    %v839 = vpop.f32.mrb[0].mxu0
    %v840 = vadd.f32 %v784, %v839
    %v841 = vpop.f32.mrb[0].mxu0
    %842 = vmatprep.mubr.bf16.mxu0 0
    %843 = vmatmul.mubr.bf16.gmra.mrb[0].mxu0 %v593
    %v844 = vpop.f32.mrb[0].mxu0
    %v845 = vadd.f32 %v789, %v844
    %v846 = vpop.f32.mrb[0].mxu0
    %v847 = vpop.f32.mrb[0].mxu0
    %v848 = vpop.f32.mrb[0].mxu0
    %849 = vdwg.mxu0
    %v851 = vlaneseq
    %v852 = vshrl.u32 %v851, 7
    %v853 = vsub.s32 0, %v852
    %v854 = vrot.slane %v542, %v853
    %v856 = vadd.f32 %v854, %v829
    %v857 = vadd.f32 %v854, %v832
    %v858 = vadd.f32 %v854, %v837
    %v859 = vadd.f32 %v854, %v840
    %v860 = vadd.f32 %v854, %v845
    %v861 = vmul.f32 %v856, %v94
    %v862 = vmul.f32 %v857, %v99
    %v863 = vmul.f32 %v858, %v104
    %v864 = vmul.f32 %v859, %v109
    %v865 = vmul.f32 %v860, %v114
    %s866 = scalar_lea.vmem [#allocation7], 192
    %v867 = vld [vmem:[%s866] sm:$0xf]
    %v868 = vld [vmem:[%s866 + $0x4] sm:$0xf]
    %v869 = vld [vmem:[%s866 + $0x8] sm:$0xf]
    %v870 = vld [vmem:[%s866 + $0xc] sm:$0xf]
    %v871 = vld [vmem:[%s866 + $0x10] sm:$0xf]
    %v872 = vld [vmem:[%s866 + $0x14] sm:$0xf]
    %v873 = vld [vmem:[%s866 + $0x18] sm:$0xf]
    %v874 = vld [vmem:[%s866 + $0x1c] sm:$0xf]
    %v875 = vld [vmem:[%s866 + $0x20] sm:$0xf]
    %v876 = vld [vmem:[%s866 + $0x24] sm:$0xf]
    %v877 = vld [vmem:[%s866 + $0x28] sm:$0xf]
    %v878 = vld [vmem:[%s866 + $0x2c] sm:$0xf]
    %v879 = vld [vmem:[%s866 + $0x30] sm:$0xf]
    %v880 = vld [vmem:[%s866 + $0x34] sm:$0xf]
    %v881 = vld [vmem:[%s866 + $0x38] sm:$0xf]
    %v882 = vld [vmem:[%s866 + $0x3c] sm:$0xf]
    %v883 = vld [vmem:[%s866 + $0x40] sm:$0xf]
    %v884 = vld [vmem:[%s866 + $0x44] sm:$0xf]
    %v885 = vld [vmem:[%s866 + $0x48] sm:$0xf]
    %v886 = vld [vmem:[%s866 + $0x4c] sm:$0xf]
    %v887 = vld [vmem:[%s866 + $0x50] sm:$0xf]
    %v888 = vld [vmem:[%s866 + $0x54] sm:$0xf]
    %v889 = vld [vmem:[%s866 + $0x58] sm:$0xf]
    %v890 = vld [vmem:[%s866 + $0x5c] sm:$0xf]
    %v891 = vld [vmem:[%s866 + $0x60] sm:$0xf]
    %v892 = vld [vmem:[%s866 + $0x64] sm:$0xf]
    %v893 = vld [vmem:[%s866 + $0x68] sm:$0xf]
    %v894 = vld [vmem:[%s866 + $0x6c] sm:$0xf]
    %v895 = vld [vmem:[%s866 + $0x70] sm:$0xf]
    %v896 = vld [vmem:[%s866 + $0x74] sm:$0xf]
    %v897 = vld [vmem:[%s866 + $0x78] sm:$0xf]
    %v898 = vld [vmem:[%s866 + $0x7c] sm:$0xf]
    %v899 = vld [vmem:[%s866 + $0x80] sm:$0xf]
    %v900 = vld [vmem:[%s866 + $0x84] sm:$0xf]
    %v901 = vld [vmem:[%s866 + $0x88] sm:$0xf]
    %v902 = vld [vmem:[%s866 + $0x8c] sm:$0xf]
    %v903 = vld [vmem:[%s866 + $0x90] sm:$0xf]
    %v904 = vld [vmem:[%s866 + $0x94] sm:$0xf]
    %v905 = vld [vmem:[%s866 + $0x98] sm:$0xf]
    %v906 = vld [vmem:[%s866 + $0x9c] sm:$0xf]
    %v907 = vld [vmem:[%s866 + $0xa0] sm:$0xf]
    %v908 = vld [vmem:[%s866 + $0xa4] sm:$0xf]
    %v909 = vld [vmem:[%s866 + $0xa8] sm:$0xf]
    %v910 = vld [vmem:[%s866 + $0xac] sm:$0xf]
    %v911 = vld [vmem:[%s866 + $0xb0] sm:$0xf]
    %v912 = vld [vmem:[%s866 + $0xb4] sm:$0xf]
    %v913 = vld [vmem:[%s866 + $0xb8] sm:$0xf]
    %v914 = vld [vmem:[%s866 + $0xbc] sm:$0xf]
    %s915 = scalar_lea.vmem [#allocation8], 2
    %v916 = vld [vmem:[%s915] sm:$0x1]
    %v917 = vmax.f32 %v861, 0.0
    %v918 = vmax.f32 %v862, 0.0
    %v919 = vmax.f32 %v863, 0.0
    %v920 = vmax.f32 %v864, 0.0
    %v921 = vmax.f32 %v865, 0.0
    %v927 = vrot.slane %v917, 7
    %v928 = vrot.slane %v918, 7
    %v929 = vsel %vm177, %v927, %v928
    %v930 = vrot.slane %v919, 7
    %v931 = vsel %vm177, %v928, %v930
    %v932 = vrot.slane %v920, 7
    %v933 = vsel %vm177, %v930, %v932
    %v934 = vrot.slane %v921, 7
    %v935 = vsel %vm177, %v932, %v934
    %v941 = vsel %vm177, 0.0, %v927
    %v942 = vsel %vm193, %v935, 0.0
    %v945 = vrot.slane %v941, 2
    %v946 = vrot.slane %v929, 2
    %v947 = vsel %vm197, %v945, %v946
    %v948 = vrot.slane %v931, 2
    %v949 = vsel %vm197, %v946, %v948
    %v950 = vrot.slane %v933, 2
    %v951 = vsel %vm197, %v948, %v950
    %v952 = vrot.slane %v942, 2
    %v953 = vsel %vm197, %v950, %v952
    %v959 = vpack.c.bf16 %v929, %v941
    %v960 = vpack.c.bf16 %v918, %v917
    %v961 = vpack.c.bf16 %v949, %v947
    %v962 = vpack.c.bf16 %v933, %v931
    %v963 = vpack.c.bf16 %v920, %v919
    %v964 = vpack.c.bf16 %v953, %v951
    %v965 = vpack.c.bf16 %v942, %v942
    %v966 = vpack.c.bf16 %v921, %v921
    %v967 = vpack.c.bf16 %v952, %v952
    %v1016 = vunpack.c.l.b16 %v867
    %v1017 = vunpack.c.l.b16 %v868
    %v1018 = vunpack.c.l.b16 %v869
    %v1019 = vunpack.c.l.b16 %v870
    %v1020 = vunpack.c.l.b16 %v871
    %v1021 = vunpack.c.l.b16 %v872
    %v1022 = vunpack.c.l.b16 %v873
    %v1023 = vunpack.c.l.b16 %v874
    %v1024 = vunpack.c.l.b16 %v875
    %v1025 = vunpack.c.l.b16 %v876
    %v1026 = vunpack.c.l.b16 %v877
    %v1027 = vunpack.c.l.b16 %v878
    %v1028 = vunpack.c.l.b16 %v879
    %v1029 = vunpack.c.l.b16 %v880
    %v1030 = vunpack.c.l.b16 %v881
    %v1031 = vunpack.c.l.b16 %v882
    %v1032 = vunpack.c.l.b16 %v883
    %v1033 = vunpack.c.l.b16 %v884
    %v1034 = vunpack.c.l.b16 %v885
    %v1035 = vunpack.c.l.b16 %v886
    %v1036 = vunpack.c.l.b16 %v887
    %v1037 = vunpack.c.l.b16 %v888
    %v1038 = vunpack.c.l.b16 %v889
    %v1039 = vunpack.c.l.b16 %v890
    %v1040 = vunpack.c.l.b16 %v891
    %v1041 = vunpack.c.l.b16 %v892
    %v1042 = vunpack.c.l.b16 %v893
    %v1043 = vunpack.c.l.b16 %v894
    %v1044 = vunpack.c.l.b16 %v895
    %v1045 = vunpack.c.l.b16 %v896
    %v1046 = vunpack.c.l.b16 %v897
    %v1047 = vunpack.c.l.b16 %v898
    %v1048 = vunpack.c.l.b16 %v899
    %v1049 = vunpack.c.l.b16 %v900
    %v1050 = vunpack.c.l.b16 %v901
    %v1051 = vunpack.c.l.b16 %v902
    %v1052 = vunpack.c.l.b16 %v903
    %v1053 = vunpack.c.l.b16 %v904
    %v1054 = vunpack.c.l.b16 %v905
    %v1055 = vunpack.c.l.b16 %v906
    %v1056 = vunpack.c.l.b16 %v907
    %v1057 = vunpack.c.l.b16 %v908
    %v1058 = vunpack.c.l.b16 %v909
    %v1059 = vunpack.c.l.b16 %v910
    %v1060 = vunpack.c.l.b16 %v911
    %v1061 = vunpack.c.l.b16 %v912
    %v1062 = vunpack.c.l.b16 %v913
    %v1063 = vunpack.c.l.b16 %v914
    %v1064 = vpack.c.b16 %v1017, %v1016
    %v1065 = vpack.c.b16 %v1019, %v1018
    %v1066 = vpack.c.b16 %v1021, %v1020
    %v1067 = vpack.c.b16 %v1023, %v1022
    %v1068 = vpack.c.b16 %v1025, %v1024
    %v1069 = vpack.c.b16 %v1027, %v1026
    %v1070 = vpack.c.b16 %v1029, %v1028
    %v1071 = vpack.c.b16 %v1031, %v1030
    %v1072 = vpack.c.b16 %v1033, %v1032
    %v1073 = vpack.c.b16 %v1035, %v1034
    %v1074 = vpack.c.b16 %v1037, %v1036
    %v1075 = vpack.c.b16 %v1039, %v1038
    %v1076 = vpack.c.b16 %v1041, %v1040
    %v1077 = vpack.c.b16 %v1043, %v1042
    %v1078 = vpack.c.b16 %v1045, %v1044
    %v1079 = vpack.c.b16 %v1047, %v1046
    %v1080 = vpack.c.b16 %v1049, %v1048
    %v1081 = vpack.c.b16 %v1051, %v1050
    %v1082 = vpack.c.b16 %v1053, %v1052
    %v1083 = vpack.c.b16 %v1055, %v1054
    %v1084 = vpack.c.b16 %v1057, %v1056
    %v1085 = vpack.c.b16 %v1059, %v1058
    %v1086 = vpack.c.b16 %v1061, %v1060
    %v1087 = vpack.c.b16 %v1063, %v1062
    %1112 = vmatprep.subr.bf16.mxu0 0
    %1113 = vmatpush1.bf16.msra.mxu0 %v1064
    %1114 = vmatprep.subr.bf16.mxu0 0
    %1115 = vmatpush1.bf16.msra.mxu0 %v1065
    %1116 = vmatprep.subr.bf16.mxu0 0
    %1117 = vmatpush1.bf16.msra.mxu0 %v1066
    %1118 = vmatprep.subr.bf16.mxu0 0
    %1119 = vmatpush1.bf16.msra.mxu0 %v1067
    %1120 = vmatprep.subr.bf16.mxu0 0
    %1121 = vmatpush1.bf16.msra.mxu0 %v1068
    %1122 = vmatprep.subr.bf16.mxu0 0
    %1123 = vmatpush1.bf16.msra.mxu0 %v1069
    %1124 = vmatprep.subr.bf16.mxu0 0
    %1125 = vmatpush1.bf16.msra.mxu0 %v1070
    %1126 = vmatprep.subr.bf16.mxu0 0
    %1127 = vmatpush1.bf16.msra.mxu0 %v1071
    %1128 = vmatprep.subr.bf16.mxu0 0
    %1129 = vmatpush1.bf16.msra.mxu0 %v1072
    %1130 = vmatprep.subr.bf16.mxu0 0
    %1131 = vmatpush1.bf16.msra.mxu0 %v1073
    %1132 = vmatprep.subr.bf16.mxu0 0
    %1133 = vmatpush1.bf16.msra.mxu0 %v1074
    %1134 = vmatprep.subr.bf16.mxu0 0
    %1135 = vmatpush1.bf16.msra.mxu0 %v1075
    %1136 = vmatprep.subr.bf16.mxu0 0
    %1137 = vmatpush1.bf16.msra.mxu0 %v1076
    %1138 = vmatprep.subr.bf16.mxu0 0
    %1139 = vmatpush1.bf16.msra.mxu0 %v1077
    %1140 = vmatprep.subr.bf16.mxu0 0
    %1141 = vmatpush1.bf16.msra.mxu0 %v1078
    %1142 = vmatprep.subr.bf16.mxu0 0
    %1143 = vmatpush1.bf16.msra.mxu0 %v1079
    %1144 = vmatprep.mubr.bf16.mxu0 %v960
    %1145 = vmatmul.mubr.bf16.gmra.mrb[0].mxu0 %v959
    %v1146 = vpop.f32.mrb[0].mxu0
    %v1147 = vadd.f32 0.0, %v1146
    %v1148 = vpop.f32.mrb[0].mxu0
    %v1149 = vpop.f32.mrb[0].mxu0
    %v1150 = vadd.f32 0.0, %v1149
    %v1151 = vpop.f32.mrb[0].mxu0
    %1152 = vmatprep.mubr.bf16.mxu0 %v963
    %1153 = vmatmul.mubr.bf16.gmra.mrb[0].mxu0 %v962
    %v1154 = vpop.f32.mrb[0].mxu0
    %v1155 = vadd.f32 0.0, %v1154
    %v1156 = vpop.f32.mrb[0].mxu0
    %v1157 = vpop.f32.mrb[0].mxu0
    %v1158 = vadd.f32 0.0, %v1157
    %v1159 = vpop.f32.mrb[0].mxu0
    %1160 = vmatprep.mubr.bf16.mxu0 %v966
    %1161 = vmatmul.mubr.bf16.gmra.mrb[0].mxu0 %v965
    %v1162 = vpop.f32.mrb[0].mxu0
    %v1163 = vadd.f32 0.0, %v1162
    %v1164 = vpop.f32.mrb[0].mxu0
    %v1165 = vpop.f32.mrb[0].mxu0
    %v1166 = vpop.f32.mrb[0].mxu0
    %1167 = vdwg.mxu0
    %1168 = vmatprep.subr.bf16.mxu0 0
    %1169 = vmatpush1.bf16.msra.mxu0 %v1080
    %1170 = vmatprep.subr.bf16.mxu0 0
    %1171 = vmatpush1.bf16.msra.mxu0 %v1081
    %1172 = vmatprep.subr.bf16.mxu0 0
    %1173 = vmatpush1.bf16.msra.mxu0 %v1082
    %1174 = vmatprep.subr.bf16.mxu0 0
    %1175 = vmatpush1.bf16.msra.mxu0 %v1083
    %1176 = vmatprep.subr.bf16.mxu0 0
    %1177 = vmatpush1.bf16.msra.mxu0 %v1084
    %1178 = vmatprep.subr.bf16.mxu0 0
    %1179 = vmatpush1.bf16.msra.mxu0 %v1085
    %1180 = vmatprep.subr.bf16.mxu0 0
    %1181 = vmatpush1.bf16.msra.mxu0 %v1086
    %1182 = vmatprep.subr.bf16.mxu0 0
    %1183 = vmatpush1.bf16.msra.mxu0 %v1087
    %1184 = vmatprep.subr.bf16.mxu0 0
    %1185 = vmatpush1.bf16.msra.mxu0 0
    %1186 = vmatprep.subr.bf16.mxu0 0
    %1187 = vmatpush1.bf16.msra.mxu0 0
    %1188 = vmatprep.subr.bf16.mxu0 0
    %1189 = vmatpush1.bf16.msra.mxu0 0
    %1190 = vmatprep.subr.bf16.mxu0 0
    %1191 = vmatpush1.bf16.msra.mxu0 0
    %1192 = vmatprep.subr.bf16.mxu0 0
    %1193 = vmatpush1.bf16.msra.mxu0 0
    %1194 = vmatprep.subr.bf16.mxu0 0
    %1195 = vmatpush1.bf16.msra.mxu0 0
    %1196 = vmatprep.subr.bf16.mxu0 0
    %1197 = vmatpush1.bf16.msra.mxu0 0
    %1198 = vmatprep.subr.bf16.mxu0 0
    %1199 = vmatpush1.bf16.msra.mxu0 0
    %1200 = vmatprep.mubr.bf16.mxu0 0
    %1201 = vmatmul.mubr.bf16.gmra.mrb[0].mxu0 %v961
    %v1202 = vpop.f32.mrb[0].mxu0
    %v1203 = vadd.f32 %v1147, %v1202
    %v1204 = vpop.f32.mrb[0].mxu0
    %v1205 = vpop.f32.mrb[0].mxu0
    %v1206 = vadd.f32 %v1150, %v1205
    %v1207 = vpop.f32.mrb[0].mxu0
    %1208 = vmatprep.mubr.bf16.mxu0 0
    %1209 = vmatmul.mubr.bf16.gmra.mrb[0].mxu0 %v964
    %v1210 = vpop.f32.mrb[0].mxu0
    %v1211 = vadd.f32 %v1155, %v1210
    %v1212 = vpop.f32.mrb[0].mxu0
    %v1213 = vpop.f32.mrb[0].mxu0
    %v1214 = vadd.f32 %v1158, %v1213
    %v1215 = vpop.f32.mrb[0].mxu0
    %1216 = vmatprep.mubr.bf16.mxu0 0
    %1217 = vmatmul.mubr.bf16.gmra.mrb[0].mxu0 %v967
    %v1218 = vpop.f32.mrb[0].mxu0
    %v1219 = vadd.f32 %v1163, %v1218
    %v1220 = vpop.f32.mrb[0].mxu0
    %v1221 = vpop.f32.mrb[0].mxu0
    %v1222 = vpop.f32.mrb[0].mxu0
    %1223 = vdwg.mxu0
    %v1225 = vlaneseq
    %v1226 = vshrl.u32 %v1225, 7
    %v1227 = vsub.s32 0, %v1226
    %v1228 = vrot.slane %v916, %v1227
    %v1230 = vadd.f32 %v1228, %v1203
    %v1231 = vadd.f32 %v1228, %v1206
    %v1232 = vadd.f32 %v1228, %v1211
    %v1233 = vadd.f32 %v1228, %v1214
    %v1234 = vadd.f32 %v1228, %v1219
    %v1235 = vmul.f32 %v1230, %v94
    %v1236 = vmul.f32 %v1231, %v99
    %v1237 = vmul.f32 %v1232, %v104
    %v1238 = vmul.f32 %v1233, %v109
    %v1239 = vmul.f32 %v1234, %v114
    %v1240 = vadd.f32 %v488, %v1235
    %v1241 = vadd.f32 %v489, %v1236
    %v1242 = vadd.f32 %v490, %v1237
    %v1243 = vadd.f32 %v491, %v1238
    %v1244 = vadd.f32 %v492, %v1239
    %v1245 = vld [vmem:[%s6] sm:$0xf]
    %v1246 = vld [vmem:[%s6 + $0x4] sm:$0xf]
    %v1247 = vld [vmem:[%s6 + $0x8] sm:$0xf]
    %v1248 = vld [vmem:[%s6 + $0xc] sm:$0xf]
    %v1249 = vld [vmem:[%s6 + $0x10] sm:$0x3]
    %v1250 = vpack.c.bf16 %v122, %v121
    %v1256 = vunpack.c.l.b16 %v1245
    %v1257 = vunpack.c.l.b16 %v1246
    %v1258 = vunpack.c.l.b16 %v1247
    %v1259 = vunpack.c.l.b16 %v1248
    %v1260 = vunpack.c.l.b16 %v1249
    %v1261 = vpack.c.b16 %v1257, %v1256
    %v1262 = vpack.c.b16 %v1259, %v1258
    %v1263 = vpack.c.b16 %v1260, %v1260
    %vm1264 = vcmask 130048
    %v1266 = vsel %vm1264, %v1261, 0
    %v1269 = vsel %vm1264, %v1262, 0
    %v1272 = vsel %vm1264, %v1263, 0
    %1274 = vmatprep.subr.bf16.mxu0 0
    %1275 = vmatpush1.bf16.msra.mxu0 %v1250
    %1276 = vmatprep.subr.bf16.mxu0 0
    %1277 = vmatpush1.bf16.msra.mxu0 0
    %1278 = vmatprep.subr.bf16.mxu0 0
    %1279 = vmatpush1.bf16.msra.mxu0 0
    %1280 = vmatprep.subr.bf16.mxu0 0
    %1281 = vmatpush1.bf16.msra.mxu0 0
    %1282 = vmatprep.subr.bf16.mxu0 0
    %1283 = vmatpush1.bf16.msra.mxu0 0
    %1284 = vmatprep.subr.bf16.mxu0 0
    %1285 = vmatpush1.bf16.msra.mxu0 0
    %1286 = vmatprep.subr.bf16.mxu0 0
    %1287 = vmatpush1.bf16.msra.mxu0 0
    %1288 = vmatprep.subr.bf16.mxu0 0
    %1289 = vmatpush1.bf16.msra.mxu0 0
    %1290 = vmatprep.subr.bf16.mxu0 0
    %1291 = vmatpush1.bf16.msra.mxu0 0
    %1292 = vmatprep.subr.bf16.mxu0 0
    %1293 = vmatpush1.bf16.msra.mxu0 0
    %1294 = vmatprep.subr.bf16.mxu0 0
    %1295 = vmatpush1.bf16.msra.mxu0 0
    %1296 = vmatprep.subr.bf16.mxu0 0
    %1297 = vmatpush1.bf16.msra.mxu0 0
    %1298 = vmatprep.subr.bf16.mxu0 0
    %1299 = vmatpush1.bf16.msra.mxu0 0
    %1300 = vmatprep.subr.bf16.mxu0 0
    %1301 = vmatpush1.bf16.msra.mxu0 0
    %1302 = vmatprep.subr.bf16.mxu0 0
    %1303 = vmatpush1.bf16.msra.mxu0 0
    %1304 = vmatprep.subr.bf16.mxu0 0
    %1305 = vmatpush1.bf16.msra.mxu0 0
    %1306 = vmatprep.mubr.bf16.mxu0 0
    %1307 = vmatmul.mubr.bf16.gmra.mrb[0].mxu0 %v1266
    %v1308 = vpop.f32.mrb[0].mxu0
    %v1309 = vadd.f32 0.0, %v1308
    %v1310 = vpop.f32.mrb[0].mxu0
    %v1311 = vpop.f32.mrb[0].mxu0
    %v1312 = vadd.f32 0.0, %v1311
    %v1313 = vpop.f32.mrb[0].mxu0
    %1314 = vmatprep.mubr.bf16.mxu0 0
    %1315 = vmatmul.mubr.bf16.gmra.mrb[0].mxu0 %v1269
    %v1316 = vpop.f32.mrb[0].mxu0
    %v1317 = vadd.f32 0.0, %v1316
    %v1318 = vpop.f32.mrb[0].mxu0
    %v1319 = vpop.f32.mrb[0].mxu0
    %v1320 = vadd.f32 0.0, %v1319
    %v1321 = vpop.f32.mrb[0].mxu0
    %1322 = vmatprep.mubr.bf16.mxu0 0
    %1323 = vmatmul.mubr.bf16.gmra.mrb[0].mxu0 %v1272
    %v1324 = vpop.f32.mrb[0].mxu0
    %v1325 = vadd.f32 0.0, %v1324
    %v1326 = vpop.f32.mrb[0].mxu0
    %v1327 = vpop.f32.mrb[0].mxu0
    %v1328 = vpop.f32.mrb[0].mxu0
    %1329 = vdwg.mxu0
    %v1330 = vpack.c.bf16 %v1312, %v1309
    %v1331 = vpack.c.bf16 %v1320, %v1317
    %v1332 = vpack.c.bf16 %v1325, %v1325
    %v1333 = vld [vmem:[%s7] sm:$0xf]
    %v1334 = vld [vmem:[%s7 + $0x4] sm:$0xf]
    %v1335 = vld [vmem:[%s7 + $0x8] sm:$0xf]
    %v1336 = vld [vmem:[%s7 + $0xc] sm:$0xf]
    %v1337 = vld [vmem:[%s7 + $0x10] sm:$0xf]
    %v1338 = vld [vmem:[%s7 + $0x14] sm:$0xf]
    %v1339 = vld [vmem:[%s7 + $0x18] sm:$0xf]
    %v1340 = vld [vmem:[%s7 + $0x1c] sm:$0xf]
    %v1349 = vunpack.c.l.b16 %v1333
    %v1350 = vunpack.c.l.b16 %v1334
    %v1351 = vunpack.c.l.b16 %v1335
    %v1352 = vunpack.c.l.b16 %v1336
    %v1353 = vunpack.c.l.b16 %v1337
    %v1354 = vunpack.c.l.b16 %v1338
    %v1355 = vunpack.c.l.b16 %v1339
    %v1356 = vunpack.c.l.b16 %v1340
    %v1357 = vpack.c.b16 %v1350, %v1349
    %v1358 = vpack.c.b16 %v1352, %v1351
    %v1359 = vpack.c.b16 %v1354, %v1353
    %v1360 = vpack.c.b16 %v1356, %v1355
    %vm1365 = vcmask 523264
    %v1367 = vsel %vm1365, %v1330, 0
    %v1370 = vsel %vm1365, %v1331, 0
    %v1373 = vsel %vm1365, %v1332, 0
    %1375 = vmatprep.subr.bf16.mxu0 0
    %1376 = vmatpush1.bf16.msra.mxu0 %v1357
    %1377 = vmatprep.subr.bf16.mxu0 0
    %1378 = vmatpush1.bf16.msra.mxu0 %v1358
    %1379 = vmatprep.subr.bf16.mxu0 0
    %1380 = vmatpush1.bf16.msra.mxu0 %v1359
    %1381 = vmatprep.subr.bf16.mxu0 0
    %1382 = vmatpush1.bf16.msra.mxu0 %v1360
    %1383 = vmatprep.subr.bf16.mxu0 0
    %1384 = vmatpush1.bf16.msra.mxu0 0
    %1385 = vmatprep.subr.bf16.mxu0 0
    %1386 = vmatpush1.bf16.msra.mxu0 0
    %1387 = vmatprep.subr.bf16.mxu0 0
    %1388 = vmatpush1.bf16.msra.mxu0 0
    %1389 = vmatprep.subr.bf16.mxu0 0
    %1390 = vmatpush1.bf16.msra.mxu0 0
    %1391 = vmatprep.subr.bf16.mxu0 0
    %1392 = vmatpush1.bf16.msra.mxu0 0
    %1393 = vmatprep.subr.bf16.mxu0 0
    %1394 = vmatpush1.bf16.msra.mxu0 0
    %1395 = vmatprep.subr.bf16.mxu0 0
    %1396 = vmatpush1.bf16.msra.mxu0 0
    %1397 = vmatprep.subr.bf16.mxu0 0
    %1398 = vmatpush1.bf16.msra.mxu0 0
    %1399 = vmatprep.subr.bf16.mxu0 0
    %1400 = vmatpush1.bf16.msra.mxu0 0
    %1401 = vmatprep.subr.bf16.mxu0 0
    %1402 = vmatpush1.bf16.msra.mxu0 0
    %1403 = vmatprep.subr.bf16.mxu0 0
    %1404 = vmatpush1.bf16.msra.mxu0 0
    %1405 = vmatprep.subr.bf16.mxu0 0
    %1406 = vmatpush1.bf16.msra.mxu0 0
    %1407 = vmatprep.mubr.bf16.mxu0 0
    %1408 = vmatmul.mubr.bf16.gmra.mrb[0].mxu0 %v1367
    %v1409 = vpop.f32.mrb[0].mxu0
    %v1410 = vadd.f32 0.0, %v1409
    %v1411 = vpop.f32.mrb[0].mxu0
    %v1412 = vpop.f32.mrb[0].mxu0
    %v1413 = vadd.f32 0.0, %v1412
    %v1414 = vpop.f32.mrb[0].mxu0
    %1415 = vmatprep.mubr.bf16.mxu0 0
    %1416 = vmatmul.mubr.bf16.gmra.mrb[0].mxu0 %v1370
    %v1417 = vpop.f32.mrb[0].mxu0
    %v1418 = vadd.f32 0.0, %v1417
    %v1419 = vpop.f32.mrb[0].mxu0
    %v1420 = vpop.f32.mrb[0].mxu0
    %v1421 = vadd.f32 0.0, %v1420
    %v1422 = vpop.f32.mrb[0].mxu0
    %1423 = vmatprep.mubr.bf16.mxu0 0
    %1424 = vmatmul.mubr.bf16.gmra.mrb[0].mxu0 %v1373
    %v1425 = vpop.f32.mrb[0].mxu0
    %v1426 = vadd.f32 0.0, %v1425
    %v1427 = vpop.f32.mrb[0].mxu0
    %v1428 = vpop.f32.mrb[0].mxu0
    %v1429 = vpop.f32.mrb[0].mxu0
    %1430 = vdwg.mxu0
    %v1431 = vadd.f32 %v1240, %v1410
    %v1432 = vadd.f32 %v1241, %v1413
    %v1433 = vadd.f32 %v1242, %v1418
    %v1434 = vadd.f32 %v1243, %v1421
    %v1435 = vadd.f32 %v1244, %v1426
    %s1436 = scalar_lea.vmem [#allocation7], 384
    %v1437 = vld [vmem:[%s1436] sm:$0xf]
    %v1438 = vld [vmem:[%s1436 + $0x4] sm:$0xf]
    %v1439 = vld [vmem:[%s1436 + $0x8] sm:$0xf]
    %v1440 = vld [vmem:[%s1436 + $0xc] sm:$0xf]
    %v1441 = vld [vmem:[%s1436 + $0x10] sm:$0xf]
    %v1442 = vld [vmem:[%s1436 + $0x14] sm:$0xf]
    %v1443 = vld [vmem:[%s1436 + $0x18] sm:$0xf]
    %v1444 = vld [vmem:[%s1436 + $0x1c] sm:$0xf]
    %v1445 = vld [vmem:[%s1436 + $0x20] sm:$0xf]
    %v1446 = vld [vmem:[%s1436 + $0x24] sm:$0xf]
    %v1447 = vld [vmem:[%s1436 + $0x28] sm:$0xf]
    %v1448 = vld [vmem:[%s1436 + $0x2c] sm:$0xf]
    %v1449 = vld [vmem:[%s1436 + $0x30] sm:$0xf]
    %v1450 = vld [vmem:[%s1436 + $0x34] sm:$0xf]
    %v1451 = vld [vmem:[%s1436 + $0x38] sm:$0xf]
    %v1452 = vld [vmem:[%s1436 + $0x3c] sm:$0xf]
    %v1453 = vld [vmem:[%s1436 + $0x40] sm:$0xf]
    %v1454 = vld [vmem:[%s1436 + $0x44] sm:$0xf]
    %v1455 = vld [vmem:[%s1436 + $0x48] sm:$0xf]
    %v1456 = vld [vmem:[%s1436 + $0x4c] sm:$0xf]
    %v1457 = vld [vmem:[%s1436 + $0x50] sm:$0xf]
    %v1458 = vld [vmem:[%s1436 + $0x54] sm:$0xf]
    %v1459 = vld [vmem:[%s1436 + $0x58] sm:$0xf]
    %v1460 = vld [vmem:[%s1436 + $0x5c] sm:$0xf]
    %v1461 = vld [vmem:[%s1436 + $0x60] sm:$0xf]
    %v1462 = vld [vmem:[%s1436 + $0x64] sm:$0xf]
    %v1463 = vld [vmem:[%s1436 + $0x68] sm:$0xf]
    %v1464 = vld [vmem:[%s1436 + $0x6c] sm:$0xf]
    %v1465 = vld [vmem:[%s1436 + $0x70] sm:$0xf]
    %v1466 = vld [vmem:[%s1436 + $0x74] sm:$0xf]
    %v1467 = vld [vmem:[%s1436 + $0x78] sm:$0xf]
    %v1468 = vld [vmem:[%s1436 + $0x7c] sm:$0xf]
    %v1469 = vld [vmem:[%s1436 + $0x80] sm:$0xf]
    %v1470 = vld [vmem:[%s1436 + $0x84] sm:$0xf]
    %v1471 = vld [vmem:[%s1436 + $0x88] sm:$0xf]
    %v1472 = vld [vmem:[%s1436 + $0x8c] sm:$0xf]
    %v1473 = vld [vmem:[%s1436 + $0x90] sm:$0xf]
    %v1474 = vld [vmem:[%s1436 + $0x94] sm:$0xf]
    %v1475 = vld [vmem:[%s1436 + $0x98] sm:$0xf]
    %v1476 = vld [vmem:[%s1436 + $0x9c] sm:$0xf]
    %v1477 = vld [vmem:[%s1436 + $0xa0] sm:$0xf]
    %v1478 = vld [vmem:[%s1436 + $0xa4] sm:$0xf]
    %v1479 = vld [vmem:[%s1436 + $0xa8] sm:$0xf]
    %v1480 = vld [vmem:[%s1436 + $0xac] sm:$0xf]
    %v1481 = vld [vmem:[%s1436 + $0xb0] sm:$0xf]
    %v1482 = vld [vmem:[%s1436 + $0xb4] sm:$0xf]
    %v1483 = vld [vmem:[%s1436 + $0xb8] sm:$0xf]
    %v1484 = vld [vmem:[%s1436 + $0xbc] sm:$0xf]
    %s1485 = scalar_lea.vmem [#allocation8], 3
    %v1486 = vld [vmem:[%s1485] sm:$0x1]
    %v1487 = vmax.f32 %v1431, 0.0
    %v1488 = vmax.f32 %v1432, 0.0
    %v1489 = vmax.f32 %v1433, 0.0
    %v1490 = vmax.f32 %v1434, 0.0
    %v1491 = vmax.f32 %v1435, 0.0
    %v1497 = vrot.slane %v1487, 7
    %v1498 = vrot.slane %v1488, 7
    %v1499 = vsel %vm177, %v1497, %v1498
    %v1500 = vrot.slane %v1489, 7
    %v1501 = vsel %vm177, %v1498, %v1500
    %v1502 = vrot.slane %v1490, 7
    %v1503 = vsel %vm177, %v1500, %v1502
    %v1504 = vrot.slane %v1491, 7
    %v1505 = vsel %vm177, %v1502, %v1504
    %v1511 = vsel %vm177, 0.0, %v1497
    %v1512 = vsel %vm193, %v1505, 0.0
    %v1515 = vrot.slane %v1511, 2
    %v1516 = vrot.slane %v1499, 2
    %v1517 = vsel %vm197, %v1515, %v1516
    %v1518 = vrot.slane %v1501, 2
    %v1519 = vsel %vm197, %v1516, %v1518
    %v1520 = vrot.slane %v1503, 2
    %v1521 = vsel %vm197, %v1518, %v1520
    %v1522 = vrot.slane %v1512, 2
    %v1523 = vsel %vm197, %v1520, %v1522
    %v1529 = vpack.c.bf16 %v1499, %v1511
    %v1530 = vpack.c.bf16 %v1488, %v1487
    %v1531 = vpack.c.bf16 %v1519, %v1517
    %v1532 = vpack.c.bf16 %v1503, %v1501
    %v1533 = vpack.c.bf16 %v1490, %v1489
    %v1534 = vpack.c.bf16 %v1523, %v1521
    %v1535 = vpack.c.bf16 %v1512, %v1512
    %v1536 = vpack.c.bf16 %v1491, %v1491
    %v1537 = vpack.c.bf16 %v1522, %v1522
    %v1586 = vunpack.c.l.b16 %v1437
    %v1587 = vunpack.c.l.b16 %v1438
    %v1588 = vunpack.c.l.b16 %v1439
    %v1589 = vunpack.c.l.b16 %v1440
    %v1590 = vunpack.c.l.b16 %v1441
    %v1591 = vunpack.c.l.b16 %v1442
    %v1592 = vunpack.c.l.b16 %v1443
    %v1593 = vunpack.c.l.b16 %v1444
    %v1594 = vunpack.c.l.b16 %v1445
    %v1595 = vunpack.c.l.b16 %v1446
    %v1596 = vunpack.c.l.b16 %v1447
    %v1597 = vunpack.c.l.b16 %v1448
    %v1598 = vunpack.c.l.b16 %v1449
    %v1599 = vunpack.c.l.b16 %v1450
    %v1600 = vunpack.c.l.b16 %v1451
    %v1601 = vunpack.c.l.b16 %v1452
    %v1602 = vunpack.c.l.b16 %v1453
    %v1603 = vunpack.c.l.b16 %v1454
    %v1604 = vunpack.c.l.b16 %v1455
    %v1605 = vunpack.c.l.b16 %v1456
    %v1606 = vunpack.c.l.b16 %v1457
    %v1607 = vunpack.c.l.b16 %v1458
    %v1608 = vunpack.c.l.b16 %v1459
    %v1609 = vunpack.c.l.b16 %v1460
    %v1610 = vunpack.c.l.b16 %v1461
    %v1611 = vunpack.c.l.b16 %v1462
    %v1612 = vunpack.c.l.b16 %v1463
    %v1613 = vunpack.c.l.b16 %v1464
    %v1614 = vunpack.c.l.b16 %v1465
    %v1615 = vunpack.c.l.b16 %v1466
    %v1616 = vunpack.c.l.b16 %v1467
    %v1617 = vunpack.c.l.b16 %v1468
    %v1618 = vunpack.c.l.b16 %v1469
    %v1619 = vunpack.c.l.b16 %v1470
    %v1620 = vunpack.c.l.b16 %v1471
    %v1621 = vunpack.c.l.b16 %v1472
    %v1622 = vunpack.c.l.b16 %v1473
    %v1623 = vunpack.c.l.b16 %v1474
    %v1624 = vunpack.c.l.b16 %v1475
    %v1625 = vunpack.c.l.b16 %v1476
    %v1626 = vunpack.c.l.b16 %v1477
    %v1627 = vunpack.c.l.b16 %v1478
    %v1628 = vunpack.c.l.b16 %v1479
    %v1629 = vunpack.c.l.b16 %v1480
    %v1630 = vunpack.c.l.b16 %v1481
    %v1631 = vunpack.c.l.b16 %v1482
    %v1632 = vunpack.c.l.b16 %v1483
    %v1633 = vunpack.c.l.b16 %v1484
    %v1634 = vpack.c.b16 %v1587, %v1586
    %v1635 = vpack.c.b16 %v1589, %v1588
    %v1636 = vpack.c.b16 %v1591, %v1590
    %v1637 = vpack.c.b16 %v1593, %v1592
    %v1638 = vpack.c.b16 %v1595, %v1594
    %v1639 = vpack.c.b16 %v1597, %v1596
    %v1640 = vpack.c.b16 %v1599, %v1598
    %v1641 = vpack.c.b16 %v1601, %v1600
    %v1642 = vpack.c.b16 %v1603, %v1602
    %v1643 = vpack.c.b16 %v1605, %v1604
    %v1644 = vpack.c.b16 %v1607, %v1606
    %v1645 = vpack.c.b16 %v1609, %v1608
    %v1646 = vpack.c.b16 %v1611, %v1610
    %v1647 = vpack.c.b16 %v1613, %v1612
    %v1648 = vpack.c.b16 %v1615, %v1614
    %v1649 = vpack.c.b16 %v1617, %v1616
    %v1650 = vpack.c.b16 %v1619, %v1618
    %v1651 = vpack.c.b16 %v1621, %v1620
    %v1652 = vpack.c.b16 %v1623, %v1622
    %v1653 = vpack.c.b16 %v1625, %v1624
    %v1654 = vpack.c.b16 %v1627, %v1626
    %v1655 = vpack.c.b16 %v1629, %v1628
    %v1656 = vpack.c.b16 %v1631, %v1630
    %v1657 = vpack.c.b16 %v1633, %v1632
    %1682 = vmatprep.subr.bf16.mxu0 0
    %1683 = vmatpush1.bf16.msra.mxu0 %v1634
    %1684 = vmatprep.subr.bf16.mxu0 0
    %1685 = vmatpush1.bf16.msra.mxu0 %v1635
    %1686 = vmatprep.subr.bf16.mxu0 0
    %1687 = vmatpush1.bf16.msra.mxu0 %v1636
    %1688 = vmatprep.subr.bf16.mxu0 0
    %1689 = vmatpush1.bf16.msra.mxu0 %v1637
    %1690 = vmatprep.subr.bf16.mxu0 0
    %1691 = vmatpush1.bf16.msra.mxu0 %v1638
    %1692 = vmatprep.subr.bf16.mxu0 0
    %1693 = vmatpush1.bf16.msra.mxu0 %v1639
    %1694 = vmatprep.subr.bf16.mxu0 0
    %1695 = vmatpush1.bf16.msra.mxu0 %v1640
    %1696 = vmatprep.subr.bf16.mxu0 0
    %1697 = vmatpush1.bf16.msra.mxu0 %v1641
    %1698 = vmatprep.subr.bf16.mxu0 0
    %1699 = vmatpush1.bf16.msra.mxu0 %v1642
    %1700 = vmatprep.subr.bf16.mxu0 0
    %1701 = vmatpush1.bf16.msra.mxu0 %v1643
    %1702 = vmatprep.subr.bf16.mxu0 0
    %1703 = vmatpush1.bf16.msra.mxu0 %v1644
    %1704 = vmatprep.subr.bf16.mxu0 0
    %1705 = vmatpush1.bf16.msra.mxu0 %v1645
    %1706 = vmatprep.subr.bf16.mxu0 0
    %1707 = vmatpush1.bf16.msra.mxu0 %v1646
    %1708 = vmatprep.subr.bf16.mxu0 0
    %1709 = vmatpush1.bf16.msra.mxu0 %v1647
    %1710 = vmatprep.subr.bf16.mxu0 0
    %1711 = vmatpush1.bf16.msra.mxu0 %v1648
    %1712 = vmatprep.subr.bf16.mxu0 0
    %1713 = vmatpush1.bf16.msra.mxu0 %v1649
    %1714 = vmatprep.mubr.bf16.mxu0 %v1530
    %1715 = vmatmul.mubr.bf16.gmra.mrb[0].mxu0 %v1529
    %v1716 = vpop.f32.mrb[0].mxu0
    %v1717 = vadd.f32 0.0, %v1716
    %v1718 = vpop.f32.mrb[0].mxu0
    %v1719 = vpop.f32.mrb[0].mxu0
    %v1720 = vadd.f32 0.0, %v1719
    %v1721 = vpop.f32.mrb[0].mxu0
    %1722 = vmatprep.mubr.bf16.mxu0 %v1533
    %1723 = vmatmul.mubr.bf16.gmra.mrb[0].mxu0 %v1532
    %v1724 = vpop.f32.mrb[0].mxu0
    %v1725 = vadd.f32 0.0, %v1724
    %v1726 = vpop.f32.mrb[0].mxu0
    %v1727 = vpop.f32.mrb[0].mxu0
    %v1728 = vadd.f32 0.0, %v1727
    %v1729 = vpop.f32.mrb[0].mxu0
    %1730 = vmatprep.mubr.bf16.mxu0 %v1536
    %1731 = vmatmul.mubr.bf16.gmra.mrb[0].mxu0 %v1535
    %v1732 = vpop.f32.mrb[0].mxu0
    %v1733 = vadd.f32 0.0, %v1732
    %v1734 = vpop.f32.mrb[0].mxu0
    %v1735 = vpop.f32.mrb[0].mxu0
    %v1736 = vpop.f32.mrb[0].mxu0
    %1737 = vdwg.mxu0
    %1738 = vmatprep.subr.bf16.mxu0 0
    %1739 = vmatpush1.bf16.msra.mxu0 %v1650
    %1740 = vmatprep.subr.bf16.mxu0 0
    %1741 = vmatpush1.bf16.msra.mxu0 %v1651
    %1742 = vmatprep.subr.bf16.mxu0 0
    %1743 = vmatpush1.bf16.msra.mxu0 %v1652
    %1744 = vmatprep.subr.bf16.mxu0 0
    %1745 = vmatpush1.bf16.msra.mxu0 %v1653
    %1746 = vmatprep.subr.bf16.mxu0 0
    %1747 = vmatpush1.bf16.msra.mxu0 %v1654
    %1748 = vmatprep.subr.bf16.mxu0 0
    %1749 = vmatpush1.bf16.msra.mxu0 %v1655
    %1750 = vmatprep.subr.bf16.mxu0 0
    %1751 = vmatpush1.bf16.msra.mxu0 %v1656
    %1752 = vmatprep.subr.bf16.mxu0 0
    %1753 = vmatpush1.bf16.msra.mxu0 %v1657
    %1754 = vmatprep.subr.bf16.mxu0 0
    %1755 = vmatpush1.bf16.msra.mxu0 0
    %1756 = vmatprep.subr.bf16.mxu0 0
    %1757 = vmatpush1.bf16.msra.mxu0 0
    %1758 = vmatprep.subr.bf16.mxu0 0
    %1759 = vmatpush1.bf16.msra.mxu0 0
    %1760 = vmatprep.subr.bf16.mxu0 0
    %1761 = vmatpush1.bf16.msra.mxu0 0
    %1762 = vmatprep.subr.bf16.mxu0 0
    %1763 = vmatpush1.bf16.msra.mxu0 0
    %1764 = vmatprep.subr.bf16.mxu0 0
    %1765 = vmatpush1.bf16.msra.mxu0 0
    %1766 = vmatprep.subr.bf16.mxu0 0
    %1767 = vmatpush1.bf16.msra.mxu0 0
    %1768 = vmatprep.subr.bf16.mxu0 0
    %1769 = vmatpush1.bf16.msra.mxu0 0
    %1770 = vmatprep.mubr.bf16.mxu0 0
    %1771 = vmatmul.mubr.bf16.gmra.mrb[0].mxu0 %v1531
    %v1772 = vpop.f32.mrb[0].mxu0
    %v1773 = vadd.f32 %v1717, %v1772
    %v1774 = vpop.f32.mrb[0].mxu0
    %v1775 = vpop.f32.mrb[0].mxu0
    %v1776 = vadd.f32 %v1720, %v1775
    %v1777 = vpop.f32.mrb[0].mxu0
    %1778 = vmatprep.mubr.bf16.mxu0 0
    %1779 = vmatmul.mubr.bf16.gmra.mrb[0].mxu0 %v1534
    %v1780 = vpop.f32.mrb[0].mxu0
    %v1781 = vadd.f32 %v1725, %v1780
    %v1782 = vpop.f32.mrb[0].mxu0
    %v1783 = vpop.f32.mrb[0].mxu0
    %v1784 = vadd.f32 %v1728, %v1783
    %v1785 = vpop.f32.mrb[0].mxu0
    %1786 = vmatprep.mubr.bf16.mxu0 0
    %1787 = vmatmul.mubr.bf16.gmra.mrb[0].mxu0 %v1537
    %v1788 = vpop.f32.mrb[0].mxu0
    %v1789 = vadd.f32 %v1733, %v1788
    %v1790 = vpop.f32.mrb[0].mxu0
    %v1791 = vpop.f32.mrb[0].mxu0
    %v1792 = vpop.f32.mrb[0].mxu0
    %1793 = vdwg.mxu0
    %v1795 = vlaneseq
    %v1796 = vshrl.u32 %v1795, 7
    %v1797 = vsub.s32 0, %v1796
    %v1798 = vrot.slane %v1486, %v1797
    %v1800 = vadd.f32 %v1798, %v1773
    %v1801 = vadd.f32 %v1798, %v1776
    %v1802 = vadd.f32 %v1798, %v1781
    %v1803 = vadd.f32 %v1798, %v1784
    %v1804 = vadd.f32 %v1798, %v1789
    %v1805 = vmul.f32 %v1800, %v94
    %v1806 = vmul.f32 %v1801, %v99
    %v1807 = vmul.f32 %v1802, %v104
    %v1808 = vmul.f32 %v1803, %v109
    %v1809 = vmul.f32 %v1804, %v114
    %s1810 = scalar_lea.vmem [#allocation7], 576
    %v1811 = vld [vmem:[%s1810] sm:$0xf]
    %v1812 = vld [vmem:[%s1810 + $0x4] sm:$0xf]
    %v1813 = vld [vmem:[%s1810 + $0x8] sm:$0xf]
    %v1814 = vld [vmem:[%s1810 + $0xc] sm:$0xf]
    %v1815 = vld [vmem:[%s1810 + $0x10] sm:$0xf]
    %v1816 = vld [vmem:[%s1810 + $0x14] sm:$0xf]
    %v1817 = vld [vmem:[%s1810 + $0x18] sm:$0xf]
    %v1818 = vld [vmem:[%s1810 + $0x1c] sm:$0xf]
    %v1819 = vld [vmem:[%s1810 + $0x20] sm:$0xf]
    %v1820 = vld [vmem:[%s1810 + $0x24] sm:$0xf]
    %v1821 = vld [vmem:[%s1810 + $0x28] sm:$0xf]
    %v1822 = vld [vmem:[%s1810 + $0x2c] sm:$0xf]
    %v1823 = vld [vmem:[%s1810 + $0x30] sm:$0xf]
    %v1824 = vld [vmem:[%s1810 + $0x34] sm:$0xf]
    %v1825 = vld [vmem:[%s1810 + $0x38] sm:$0xf]
    %v1826 = vld [vmem:[%s1810 + $0x3c] sm:$0xf]
    %v1827 = vld [vmem:[%s1810 + $0x40] sm:$0xf]
    %v1828 = vld [vmem:[%s1810 + $0x44] sm:$0xf]
    %v1829 = vld [vmem:[%s1810 + $0x48] sm:$0xf]
    %v1830 = vld [vmem:[%s1810 + $0x4c] sm:$0xf]
    %v1831 = vld [vmem:[%s1810 + $0x50] sm:$0xf]
    %v1832 = vld [vmem:[%s1810 + $0x54] sm:$0xf]
    %v1833 = vld [vmem:[%s1810 + $0x58] sm:$0xf]
    %v1834 = vld [vmem:[%s1810 + $0x5c] sm:$0xf]
    %v1835 = vld [vmem:[%s1810 + $0x60] sm:$0xf]
    %v1836 = vld [vmem:[%s1810 + $0x64] sm:$0xf]
    %v1837 = vld [vmem:[%s1810 + $0x68] sm:$0xf]
    %v1838 = vld [vmem:[%s1810 + $0x6c] sm:$0xf]
    %v1839 = vld [vmem:[%s1810 + $0x70] sm:$0xf]
    %v1840 = vld [vmem:[%s1810 + $0x74] sm:$0xf]
    %v1841 = vld [vmem:[%s1810 + $0x78] sm:$0xf]
    %v1842 = vld [vmem:[%s1810 + $0x7c] sm:$0xf]
    %v1843 = vld [vmem:[%s1810 + $0x80] sm:$0xf]
    %v1844 = vld [vmem:[%s1810 + $0x84] sm:$0xf]
    %v1845 = vld [vmem:[%s1810 + $0x88] sm:$0xf]
    %v1846 = vld [vmem:[%s1810 + $0x8c] sm:$0xf]
    %v1847 = vld [vmem:[%s1810 + $0x90] sm:$0xf]
    %v1848 = vld [vmem:[%s1810 + $0x94] sm:$0xf]
    %v1849 = vld [vmem:[%s1810 + $0x98] sm:$0xf]
    %v1850 = vld [vmem:[%s1810 + $0x9c] sm:$0xf]
    %v1851 = vld [vmem:[%s1810 + $0xa0] sm:$0xf]
    %v1852 = vld [vmem:[%s1810 + $0xa4] sm:$0xf]
    %v1853 = vld [vmem:[%s1810 + $0xa8] sm:$0xf]
    %v1854 = vld [vmem:[%s1810 + $0xac] sm:$0xf]
    %v1855 = vld [vmem:[%s1810 + $0xb0] sm:$0xf]
    %v1856 = vld [vmem:[%s1810 + $0xb4] sm:$0xf]
    %v1857 = vld [vmem:[%s1810 + $0xb8] sm:$0xf]
    %v1858 = vld [vmem:[%s1810 + $0xbc] sm:$0xf]
    %s1859 = scalar_lea.vmem [#allocation8], 4
    %v1860 = vld [vmem:[%s1859] sm:$0x1]
    %v1861 = vmax.f32 %v1805, 0.0
    %v1862 = vmax.f32 %v1806, 0.0
    %v1863 = vmax.f32 %v1807, 0.0
    %v1864 = vmax.f32 %v1808, 0.0
    %v1865 = vmax.f32 %v1809, 0.0
    %v1871 = vrot.slane %v1861, 7
    %v1872 = vrot.slane %v1862, 7
    %v1873 = vsel %vm177, %v1871, %v1872
    %v1874 = vrot.slane %v1863, 7
    %v1875 = vsel %vm177, %v1872, %v1874
    %v1876 = vrot.slane %v1864, 7
    %v1877 = vsel %vm177, %v1874, %v1876
    %v1878 = vrot.slane %v1865, 7
    %v1879 = vsel %vm177, %v1876, %v1878
    %v1885 = vsel %vm177, 0.0, %v1871
    %v1886 = vsel %vm193, %v1879, 0.0
    %v1889 = vrot.slane %v1885, 2
    %v1890 = vrot.slane %v1873, 2
    %v1891 = vsel %vm197, %v1889, %v1890
    %v1892 = vrot.slane %v1875, 2
    %v1893 = vsel %vm197, %v1890, %v1892
    %v1894 = vrot.slane %v1877, 2
    %v1895 = vsel %vm197, %v1892, %v1894
    %v1896 = vrot.slane %v1886, 2
    %v1897 = vsel %vm197, %v1894, %v1896
    %v1903 = vpack.c.bf16 %v1873, %v1885
    %v1904 = vpack.c.bf16 %v1862, %v1861
    %v1905 = vpack.c.bf16 %v1893, %v1891
    %v1906 = vpack.c.bf16 %v1877, %v1875
    %v1907 = vpack.c.bf16 %v1864, %v1863
    %v1908 = vpack.c.bf16 %v1897, %v1895
    %v1909 = vpack.c.bf16 %v1886, %v1886
    %v1910 = vpack.c.bf16 %v1865, %v1865
    %v1911 = vpack.c.bf16 %v1896, %v1896
    %v1960 = vunpack.c.l.b16 %v1811
    %v1961 = vunpack.c.l.b16 %v1812
    %v1962 = vunpack.c.l.b16 %v1813
    %v1963 = vunpack.c.l.b16 %v1814
    %v1964 = vunpack.c.l.b16 %v1815
    %v1965 = vunpack.c.l.b16 %v1816
    %v1966 = vunpack.c.l.b16 %v1817
    %v1967 = vunpack.c.l.b16 %v1818
    %v1968 = vunpack.c.l.b16 %v1819
    %v1969 = vunpack.c.l.b16 %v1820
    %v1970 = vunpack.c.l.b16 %v1821
    %v1971 = vunpack.c.l.b16 %v1822
    %v1972 = vunpack.c.l.b16 %v1823
    %v1973 = vunpack.c.l.b16 %v1824
    %v1974 = vunpack.c.l.b16 %v1825
    %v1975 = vunpack.c.l.b16 %v1826
    %v1976 = vunpack.c.l.b16 %v1827
    %v1977 = vunpack.c.l.b16 %v1828
    %v1978 = vunpack.c.l.b16 %v1829
    %v1979 = vunpack.c.l.b16 %v1830
    %v1980 = vunpack.c.l.b16 %v1831
    %v1981 = vunpack.c.l.b16 %v1832
    %v1982 = vunpack.c.l.b16 %v1833
    %v1983 = vunpack.c.l.b16 %v1834
    %v1984 = vunpack.c.l.b16 %v1835
    %v1985 = vunpack.c.l.b16 %v1836
    %v1986 = vunpack.c.l.b16 %v1837
    %v1987 = vunpack.c.l.b16 %v1838
    %v1988 = vunpack.c.l.b16 %v1839
    %v1989 = vunpack.c.l.b16 %v1840
    %v1990 = vunpack.c.l.b16 %v1841
    %v1991 = vunpack.c.l.b16 %v1842
    %v1992 = vunpack.c.l.b16 %v1843
    %v1993 = vunpack.c.l.b16 %v1844
    %v1994 = vunpack.c.l.b16 %v1845
    %v1995 = vunpack.c.l.b16 %v1846
    %v1996 = vunpack.c.l.b16 %v1847
    %v1997 = vunpack.c.l.b16 %v1848
    %v1998 = vunpack.c.l.b16 %v1849
    %v1999 = vunpack.c.l.b16 %v1850
    %v2000 = vunpack.c.l.b16 %v1851
    %v2001 = vunpack.c.l.b16 %v1852
    %v2002 = vunpack.c.l.b16 %v1853
    %v2003 = vunpack.c.l.b16 %v1854
    %v2004 = vunpack.c.l.b16 %v1855
    %v2005 = vunpack.c.l.b16 %v1856
    %v2006 = vunpack.c.l.b16 %v1857
    %v2007 = vunpack.c.l.b16 %v1858
    %v2008 = vpack.c.b16 %v1961, %v1960
    %v2009 = vpack.c.b16 %v1963, %v1962
    %v2010 = vpack.c.b16 %v1965, %v1964
    %v2011 = vpack.c.b16 %v1967, %v1966
    %v2012 = vpack.c.b16 %v1969, %v1968
    %v2013 = vpack.c.b16 %v1971, %v1970
    %v2014 = vpack.c.b16 %v1973, %v1972
    %v2015 = vpack.c.b16 %v1975, %v1974
    %v2016 = vpack.c.b16 %v1977, %v1976
    %v2017 = vpack.c.b16 %v1979, %v1978
    %v2018 = vpack.c.b16 %v1981, %v1980
    %v2019 = vpack.c.b16 %v1983, %v1982
    %v2020 = vpack.c.b16 %v1985, %v1984
    %v2021 = vpack.c.b16 %v1987, %v1986
    %v2022 = vpack.c.b16 %v1989, %v1988
    %v2023 = vpack.c.b16 %v1991, %v1990
    %v2024 = vpack.c.b16 %v1993, %v1992
    %v2025 = vpack.c.b16 %v1995, %v1994
    %v2026 = vpack.c.b16 %v1997, %v1996
    %v2027 = vpack.c.b16 %v1999, %v1998
    %v2028 = vpack.c.b16 %v2001, %v2000
    %v2029 = vpack.c.b16 %v2003, %v2002
    %v2030 = vpack.c.b16 %v2005, %v2004
    %v2031 = vpack.c.b16 %v2007, %v2006
    %2056 = vmatprep.subr.bf16.mxu0 0
    %2057 = vmatpush1.bf16.msra.mxu0 %v2008
    %2058 = vmatprep.subr.bf16.mxu0 0
    %2059 = vmatpush1.bf16.msra.mxu0 %v2009
    %2060 = vmatprep.subr.bf16.mxu0 0
    %2061 = vmatpush1.bf16.msra.mxu0 %v2010
    %2062 = vmatprep.subr.bf16.mxu0 0
    %2063 = vmatpush1.bf16.msra.mxu0 %v2011
    %2064 = vmatprep.subr.bf16.mxu0 0
    %2065 = vmatpush1.bf16.msra.mxu0 %v2012
    %2066 = vmatprep.subr.bf16.mxu0 0
    %2067 = vmatpush1.bf16.msra.mxu0 %v2013
    %2068 = vmatprep.subr.bf16.mxu0 0
    %2069 = vmatpush1.bf16.msra.mxu0 %v2014
    %2070 = vmatprep.subr.bf16.mxu0 0
    %2071 = vmatpush1.bf16.msra.mxu0 %v2015
    %2072 = vmatprep.subr.bf16.mxu0 0
    %2073 = vmatpush1.bf16.msra.mxu0 %v2016
    %2074 = vmatprep.subr.bf16.mxu0 0
    %2075 = vmatpush1.bf16.msra.mxu0 %v2017
    %2076 = vmatprep.subr.bf16.mxu0 0
    %2077 = vmatpush1.bf16.msra.mxu0 %v2018
    %2078 = vmatprep.subr.bf16.mxu0 0
    %2079 = vmatpush1.bf16.msra.mxu0 %v2019
    %2080 = vmatprep.subr.bf16.mxu0 0
    %2081 = vmatpush1.bf16.msra.mxu0 %v2020
    %2082 = vmatprep.subr.bf16.mxu0 0
    %2083 = vmatpush1.bf16.msra.mxu0 %v2021
    %2084 = vmatprep.subr.bf16.mxu0 0
    %2085 = vmatpush1.bf16.msra.mxu0 %v2022
    %2086 = vmatprep.subr.bf16.mxu0 0
    %2087 = vmatpush1.bf16.msra.mxu0 %v2023
    %2088 = vmatprep.mubr.bf16.mxu0 %v1904
    %2089 = vmatmul.mubr.bf16.gmra.mrb[0].mxu0 %v1903
    %v2090 = vpop.f32.mrb[0].mxu0
    %v2091 = vadd.f32 0.0, %v2090
    %v2092 = vpop.f32.mrb[0].mxu0
    %v2093 = vpop.f32.mrb[0].mxu0
    %v2094 = vadd.f32 0.0, %v2093
    %v2095 = vpop.f32.mrb[0].mxu0
    %2096 = vmatprep.mubr.bf16.mxu0 %v1907
    %2097 = vmatmul.mubr.bf16.gmra.mrb[0].mxu0 %v1906
    %v2098 = vpop.f32.mrb[0].mxu0
    %v2099 = vadd.f32 0.0, %v2098
    %v2100 = vpop.f32.mrb[0].mxu0
    %v2101 = vpop.f32.mrb[0].mxu0
    %v2102 = vadd.f32 0.0, %v2101
    %v2103 = vpop.f32.mrb[0].mxu0
    %2104 = vmatprep.mubr.bf16.mxu0 %v1910
    %2105 = vmatmul.mubr.bf16.gmra.mrb[0].mxu0 %v1909
    %v2106 = vpop.f32.mrb[0].mxu0
    %v2107 = vadd.f32 0.0, %v2106
    %v2108 = vpop.f32.mrb[0].mxu0
    %v2109 = vpop.f32.mrb[0].mxu0
    %v2110 = vpop.f32.mrb[0].mxu0
    %2111 = vdwg.mxu0
    %2112 = vmatprep.subr.bf16.mxu0 0
    %2113 = vmatpush1.bf16.msra.mxu0 %v2024
    %2114 = vmatprep.subr.bf16.mxu0 0
    %2115 = vmatpush1.bf16.msra.mxu0 %v2025
    %2116 = vmatprep.subr.bf16.mxu0 0
    %2117 = vmatpush1.bf16.msra.mxu0 %v2026
    %2118 = vmatprep.subr.bf16.mxu0 0
    %2119 = vmatpush1.bf16.msra.mxu0 %v2027
    %2120 = vmatprep.subr.bf16.mxu0 0
    %2121 = vmatpush1.bf16.msra.mxu0 %v2028
    %2122 = vmatprep.subr.bf16.mxu0 0
    %2123 = vmatpush1.bf16.msra.mxu0 %v2029
    %2124 = vmatprep.subr.bf16.mxu0 0
    %2125 = vmatpush1.bf16.msra.mxu0 %v2030
    %2126 = vmatprep.subr.bf16.mxu0 0
    %2127 = vmatpush1.bf16.msra.mxu0 %v2031
    %2128 = vmatprep.subr.bf16.mxu0 0
    %2129 = vmatpush1.bf16.msra.mxu0 0
    %2130 = vmatprep.subr.bf16.mxu0 0
    %2131 = vmatpush1.bf16.msra.mxu0 0
    %2132 = vmatprep.subr.bf16.mxu0 0
    %2133 = vmatpush1.bf16.msra.mxu0 0
    %2134 = vmatprep.subr.bf16.mxu0 0
    %2135 = vmatpush1.bf16.msra.mxu0 0
    %2136 = vmatprep.subr.bf16.mxu0 0
    %2137 = vmatpush1.bf16.msra.mxu0 0
    %2138 = vmatprep.subr.bf16.mxu0 0
    %2139 = vmatpush1.bf16.msra.mxu0 0
    %2140 = vmatprep.subr.bf16.mxu0 0
    %2141 = vmatpush1.bf16.msra.mxu0 0
    %2142 = vmatprep.subr.bf16.mxu0 0
    %2143 = vmatpush1.bf16.msra.mxu0 0
    %2144 = vmatprep.mubr.bf16.mxu0 0
    %2145 = vmatmul.mubr.bf16.gmra.mrb[0].mxu0 %v1905
    %v2146 = vpop.f32.mrb[0].mxu0
    %v2147 = vadd.f32 %v2091, %v2146
    %v2148 = vpop.f32.mrb[0].mxu0
    %v2149 = vpop.f32.mrb[0].mxu0
    %v2150 = vadd.f32 %v2094, %v2149
    %v2151 = vpop.f32.mrb[0].mxu0
    %2152 = vmatprep.mubr.bf16.mxu0 0
    %2153 = vmatmul.mubr.bf16.gmra.mrb[0].mxu0 %v1908
    %v2154 = vpop.f32.mrb[0].mxu0
    %v2155 = vadd.f32 %v2099, %v2154
    %v2156 = vpop.f32.mrb[0].mxu0
    %v2157 = vpop.f32.mrb[0].mxu0
    %v2158 = vadd.f32 %v2102, %v2157
    %v2159 = vpop.f32.mrb[0].mxu0
    %2160 = vmatprep.mubr.bf16.mxu0 0
    %2161 = vmatmul.mubr.bf16.gmra.mrb[0].mxu0 %v1911
    %v2162 = vpop.f32.mrb[0].mxu0
    %v2163 = vadd.f32 %v2107, %v2162
    %v2164 = vpop.f32.mrb[0].mxu0
    %v2165 = vpop.f32.mrb[0].mxu0
    %v2166 = vpop.f32.mrb[0].mxu0
    %2167 = vdwg.mxu0
    %v2169 = vlaneseq
    %v2170 = vshrl.u32 %v2169, 7
    %v2171 = vsub.s32 0, %v2170
    %v2172 = vrot.slane %v1860, %v2171
    %v2174 = vadd.f32 %v2172, %v2147
    %v2175 = vadd.f32 %v2172, %v2150
    %v2176 = vadd.f32 %v2172, %v2155
    %v2177 = vadd.f32 %v2172, %v2158
    %v2178 = vadd.f32 %v2172, %v2163
    %v2179 = vmul.f32 %v2174, %v94
    %v2180 = vmul.f32 %v2175, %v99
    %v2181 = vmul.f32 %v2176, %v104
    %v2182 = vmul.f32 %v2177, %v109
    %v2183 = vmul.f32 %v2178, %v114
    %v2184 = vadd.f32 %v1431, %v2179
    %v2185 = vadd.f32 %v1432, %v2180
    %v2186 = vadd.f32 %v1433, %v2181
    %v2187 = vadd.f32 %v1434, %v2182
    %v2188 = vadd.f32 %v1435, %v2183
    %2189 = vst [vmem:[#allocation10] sm:$0xff] %v2184
    %2190 = vst [vmem:[#allocation10 + $0x8] sm:$0xff] %v2185
    %2191 = vst [vmem:[#allocation10 + $0x10] sm:$0xff] %v2186
    %2192 = vst [vmem:[#allocation10 + $0x18] sm:$0xff] %v2187
    %2193 = vst [vmem:[#allocation10 + $0x20] sm:$0xf] %v2188
    // Predicated region
    $region50: #{tpu_custom_call.1} parent=1 // pred_check
      _
    $region51: #{tpu_custom_call.1} parent=1 // pred_check_branch
      %2195 = sbr.rel (0) target = $region53
    $region52: #{tpu_custom_call.1} parent=1 // pred_region
      %s2197 = ssub.s32 640, 640
      %2198 = vsyncadd [#allocation4], %s2197
      %s2199 = sshll.u32 [#allocation10], 4
      %s2200 = int_to_ptr.vmem [resolvable:$true] %s2199
      %2205 = dma.vmem_to_hbm [thread:$0]  %s2200, 640, %s8, [#allocation4], 128, 128, 8
    $region53: #{tpu_custom_call.1} parent=1 // pred_fallthru
      _
    // Predicated region
    $region54: #{tpu_custom_call.1} parent=1 // pred_check
      _
    $region55: #{tpu_custom_call.1} parent=1 // pred_check_branch
      %2207 = sbr.rel (0) target = $region57
    $region56: #{tpu_custom_call.1} parent=1 // pred_region
      %2208 = dma.done [#allocation4], 640
    $region57: #{tpu_custom_call.1} parent=1 // pred_fallthru
      _
    %2209 = vsyncpa [#allocation3], 1
    %2210 = vsyncpa [#allocation6], 1
    %2211 = vsyncpa [#allocation9], 1
    %2212 = vsyncpa [#allocation4], 1

</llo_original>
